<compile_context>
chip_gen: v7x
topology: tpu7x:2x2x1
jax: 0.10.0
libtpu: 0.0.40
codegen_flags: <defaults>
</compile_context>

<pallas_src>
import functools
import math

import numpy as np
import jax
import jax.numpy as jnp
from jax.experimental import pallas as pl
from jax.experimental.pallas import tpu as pltpu

# ----------------------------- configuration --------------------------------
B = 1024                           # batched so launch/DMA overhead amortizes
BLOCK_B = 256                      # batch lanes per grid step (multiple of 128)
DIM_IN = 32
DIM_OUT = 32
GATE_WINDOW = 13
N_POLY_ORDER = 3
N_POLY_POINTS = 10
PRE_DIM_OUT = DIM_OUT + GATE_WINDOW - 1          # 'stretch' padding mode
D_MODEL, N_HEAD, D_FF, N_LAYERS = 2, 1, 64, 3    # transformer hyper-params


# --------------------- bicubic (align_corners=True) matrix ------------------
def bicubic_interp_matrix(in_size, out_size, A=-0.75):
    """1-D bicubic interpolation (align_corners=True) as a matrix [in, out]."""
    def cub1(u):  # |u| in [0, 1]
        return ((A + 2.0) * u - (A + 3.0)) * u * u + 1.0

    def cub2(u):  # |u| in [1, 2]
        return ((A * u - 5.0 * A) * u + 8.0 * A) * u - 4.0 * A

    M = np.zeros((in_size, out_size), dtype=np.float32)
    scale = (in_size - 1) / (out_size - 1) if out_size > 1 else 0.0
    for j in range(out_size):
        x = scale * j
        xf = int(math.floor(x))
        t = x - xf
        coeffs = (cub2(t + 1.0), cub1(t), cub1(1.0 - t), cub2(2.0 - t))
        for k, c in enumerate(coeffs):
            idx = min(max(xf - 1 + k, 0), in_size - 1)
            M[idx, j] += c
    return M


# --------------------- ene_pos stand-in (plain-JAX glue) --------------------
# TODO(synk): TransformerEnergyPositionPredictor source was not provided; a
# minimal deterministic transformer-encoder stand-in (eval mode, dropout off)
# producing tanh-bounded positions in [-1, 1] is used instead.
def standin_transformer_params(key, n_grid, d_model, d_ff, nlayers, dim_out):
    k_in, k_pos, k_head = jax.random.split(key, 3)

    def rn(k, shape, scale=0.1):
        return scale * jax.random.normal(k, shape, dtype=jnp.float32)

    params = {
        "w_in": rn(k_in, (1, d_model)),
        "pos": rn(k_pos, (n_grid, d_model)),
        "w_head": rn(k_head, (n_grid * d_model, dim_out), scale=0.05),
        "b_head": jnp.zeros((dim_out,), jnp.float32),
        "layers": [],
    }
    for l in range(nlayers):
        lk = jax.random.split(jax.random.fold_in(key, 100 + l), 6)
        params["layers"].append({
            "wq": rn(lk[0], (d_model, d_model)), "wk": rn(lk[1], (d_model, d_model)),
            "wv": rn(lk[2], (d_model, d_model)), "wo": rn(lk[3], (d_model, d_model)),
            "w1": rn(lk[4], (d_model, d_ff)), "b1": jnp.zeros((d_ff,), jnp.float32),
            "w2": rn(lk[5], (d_ff, d_model)), "b2": jnp.zeros((d_model,), jnp.float32),
            "ln1_g": jnp.ones((d_model,), jnp.float32), "ln1_b": jnp.zeros((d_model,), jnp.float32),
            "ln2_g": jnp.ones((d_model,), jnp.float32), "ln2_b": jnp.zeros((d_model,), jnp.float32),
        })
    return params


def _layer_norm(x, g, b, eps=1e-5):
    m = x.mean(-1, keepdims=True)
    v = ((x - m) ** 2).mean(-1, keepdims=True)
    return (x - m) * jax.lax.rsqrt(v + eps) * g + b


def ene_pos_standin(params, spec):
    x = spec[:, :, None] @ params["w_in"] + params["pos"][None]   # [B, n_grid, d_model]
    d_model = x.shape[-1]
    for lp in params["layers"]:
        q, k, v = x @ lp["wq"], x @ lp["wk"], x @ lp["wv"]
        scores = q @ jnp.swapaxes(k, -1, -2) / math.sqrt(d_model / N_HEAD)
        attn = jax.nn.softmax(scores, axis=-1)
        x = _layer_norm(x + (attn @ v) @ lp["wo"], lp["ln1_g"], lp["ln1_b"])
        ff = jax.nn.relu(x @ lp["w1"] + lp["b1"]) @ lp["w2"] + lp["b2"]
        x = _layer_norm(x + ff, lp["ln2_g"], lp["ln2_b"])
    flat = x.reshape(x.shape[0], -1)
    return jnp.tanh(flat @ params["w_head"] + params["b_head"])    # [B, dim_out] in [-1, 1]


# ------------------------------ Pallas kernel --------------------------------
def _exlayers_kernel(spec_ref, ep_ref, interp_ref, pw_ref, out_ref, pad_ref,
                     *, gate_window, dim_out, n_poly_order):
    # Feature-major layout: batch on the lane (last) axis.
    #   spec_ref:   [dim_in,       block_b]   raw input spectra block
    #   ep_ref:     [dim_out,      block_b]   ene_pos tanh output block
    #   interp_ref: [pre_dim_out,  dim_in ]   bicubic 'stretch' matrix (transposed)
    #   pw_ref:     [dim_out, n_poly_order+1] interpolated polynomial weights (T)
    #   out_ref:    [dim_out,      block_b]
    #   pad_ref:    [pre_dim_out,  block_b]   VMEM scratch for stretched spectra

    # pad_spectra (stretch): bicubic interpolation == one MXU matmul.
    pad_ref[...] = jnp.dot(interp_ref[...], spec_ref[...],
                           preferred_element_type=jnp.float32)

    # ep = tanh_out * gw/2 + gw/2, clamped exactly like TwoHotGenerator.
    half = gate_window / 2.0
    ep = jnp.clip(ep_ref[...] * half + half, 0.0, gate_window - 1.0 - 1e-6)

    # conv1d(identity-unfold) + two-hot gating + sum over gate windows.
    # Two-hot weight of window g equals the tent function relu(1 - |ep - g|),
    # identical to the floor/frac construction in TwoHotGenerator but without
    # floor / int casts / equality selects.
    acc = jnp.zeros_like(ep)
    for g in range(gate_window):
        win = pad_ref[g:g + dim_out, :]                    # sublane-offset load
        tw = jnp.maximum(1.0 - jnp.abs(ep - float(g)), 0.0)
        acc = acc + win * tw

    # Polynomial correction of the *gated* spectrum (as in the module), Horner:
    #   d = ((pw3*s + pw2)*s + pw1)*s + pw0
    pw = pw_ref[...]                                       # [dim_out, P+1]
    d = pw[:, n_poly_order:n_poly_order + 1] * acc + pw[:, n_poly_order - 1:n_poly_order]
    for p in range(n_poly_order - 2, -1, -1):
        d = d * acc + pw[:, p:p + 1]

    out_ref[...] = (acc + d).astype(out_ref.dtype)


def exlayers_pallas(spec_t, ep_t, interp_t, pw_t, *, block_b):
    dim_in, bsz = spec_t.shape
    dim_out = ep_t.shape[0]
    pre_dim_out = interp_t.shape[0]
    n_poly_order = pw_t.shape[1] - 1
    assert bsz % block_b == 0 and block_b % 128 == 0

    kernel = functools.partial(
        _exlayers_kernel,
        gate_window=GATE_WINDOW,
        dim_out=dim_out,
        n_poly_order=n_poly_order,
    )
    return pl.pallas_call(
        kernel,
        out_shape=jax.ShapeDtypeStruct((dim_out, bsz), jnp.float32),
        grid=(bsz // block_b,),
        in_specs=[
            pl.BlockSpec((dim_in, block_b), lambda i: (0, i)),
            pl.BlockSpec((dim_out, block_b), lambda i: (0, i)),
            pl.BlockSpec((pre_dim_out, dim_in), lambda i: (0, 0)),
            pl.BlockSpec((dim_out, n_poly_order + 1), lambda i: (0, 0)),
        ],
        out_specs=pl.BlockSpec((dim_out, block_b), lambda i: (0, i)),
        scratch_shapes=[pltpu.VMEM((pre_dim_out, block_b), jnp.float32)],
        compiler_params=pltpu.CompilerParams(
            dimension_semantics=("parallel",)),
    )(spec_t, ep_t, interp_t, pw_t)


def make_forward(tr_params, interp_t, pw_t, block_b):
    """One jit for the whole chain: ene_pos + layout plumbing + Pallas kernel."""
    @jax.jit
    def fwd(spec):                                   # spec: [B, dim_in]
        ep = ene_pos_standin(tr_params, spec)        # [B, dim_out], in [-1, 1]
        out_t = exlayers_pallas(spec.T, ep.T, interp_t, pw_t, block_b=block_b)
        return out_t.T, ep                           # [B, dim_out]
    return fwd


# ------------------------------ pure-JAX reference ---------------------------
def exlayers_reference(spec, ep_raw, interp_mat, pw):
    """Batch-major reference following the PyTorch module structure."""
    padded = spec @ interp_mat                                    # [B, pre_dim_out]
    ep = jnp.clip(ep_raw * (GATE_WINDOW / 2.0) + (GATE_WINDOW / 2.0),
                  0.0, GATE_WINDOW - 1.0 - 1e-6)
    lower = jnp.floor(ep)
    frac = ep - lower
    g = jnp.arange(GATE_WINDOW, dtype=jnp.float32)[None, :, None]
    twohot = (jnp.where(g == lower[:, None, :], 1.0 - frac[:, None, :], 0.0)
              + jnp.where(g == lower[:, None, :] + 1.0, frac[:, None, :], 0.0))
    unfold = jnp.stack([padded[:, gg:gg + DIM_OUT] for gg in range(GATE_WINDOW)],
                       axis=1)                                    # [B, gw, dim_out]
    s = (unfold * twohot).sum(axis=1)
    d = jnp.zeros_like(s)
    xpow = jnp.ones_like(s)
    for p in range(N_POLY_ORDER + 1):
        d = d + xpow * pw[p][None, :]
        xpow = xpow * s
    return s + d


# ---------------------------------- main --------------------------------------
if __name__ == "__main__":
    key = jax.random.PRNGKey(0)
    k_spec, k_tr, k_poly = jax.random.split(key, 3)

    spec = jax.random.uniform(k_spec, (B, DIM_IN), dtype=jnp.float32)

    tr_params = standin_transformer_params(k_tr, DIM_IN, D_MODEL, D_FF, N_LAYERS, DIM_OUT)
    # TODO(synk): module __init__ uses torch.zeros for polynomial_weights; small
    # deterministic random values are used here so the polynomial path is exercised.
    poly_w = 0.01 * jax.random.normal(
        k_poly, (N_POLY_ORDER + 1, N_POLY_POINTS), dtype=jnp.float32)

    # parameter / constant glue: bicubic interpolation matrices (constant folded)
    interp_mat = jnp.asarray(bicubic_interp_matrix(DIM_IN, PRE_DIM_OUT))    # stretch
    pw_interp = jnp.asarray(bicubic_interp_matrix(N_POLY_POINTS, DIM_OUT))  # F.interpolate on params
    pw = poly_w @ pw_interp                                                 # [P+1, dim_out]

    fwd = make_forward(tr_params, interp_mat.T, pw.T, BLOCK_B)
    out, ep_raw = fwd(spec)
    out = jax.block_until_ready(out)

    ref = exlayers_reference(spec, ep_raw, interp_mat, pw)
    assert out.shape == (B, DIM_OUT)
    assert jnp.allclose(out, ref, rtol=2e-3, atol=2e-3), "kernel/reference mismatch"

    print("KERNEL_OK")
</pallas_src>

<mosaic_0001>
module attributes {stable_mosaic.version = 11 : i64} {
  func.func @_exlayers_kernel(%arg0: i32, %arg1: memref<32x256xf32, #tpu.memory_space<vmem>>, %arg2: memref<32x256xf32, #tpu.memory_space<vmem>>, %arg3: memref<44x32xf32, #tpu.memory_space<vmem>>, %arg4: memref<32x4xf32, #tpu.memory_space<vmem>>, %arg5: memref<32x256xf32, #tpu.memory_space<vmem>>, %arg6: memref<44x256xf32, #tpu.memory_space<vmem>>) attributes {dimension_semantics = [#tpu.dimension_semantics<parallel>], iteration_bounds = array<i64: 4>, scalar_prefetch = 0 : i64, scratch_operands = 1 : i64, tpu.core_type = #tpu.core_type<tc>, window_params = [{transform_indices = @transform_0, window_bounds = array<i64: 32, 256>}, {transform_indices = @transform_1, window_bounds = array<i64: 32, 256>}, {pipeline_mode = #tpu.pipeline_mode<synchronous>, transform_indices = @transform_2, window_bounds = array<i64: 44, 32>}, {pipeline_mode = #tpu.pipeline_mode<synchronous>, transform_indices = @transform_3, window_bounds = array<i64: 32, 4>}, {transform_indices = @transform_4, window_bounds = array<i64: 32, 256>}]} {
    %c0 = arith.constant 0 : index
    %c0_0 = arith.constant 0 : index
    %0 = vector.load %arg3[%c0, %c0_0] : memref<44x32xf32, #tpu.memory_space<vmem>>, vector<44x32xf32>
    %c0_1 = arith.constant 0 : index
    %c0_2 = arith.constant 0 : index
    %1 = vector.load %arg1[%c0_1, %c0_2] : memref<32x256xf32, #tpu.memory_space<vmem>>, vector<32x256xf32>
    %cst = arith.constant dense<0.000000e+00> : vector<44x256xf32>
    %2 = tpu.matmul %0, %1, %cst {dimension_numbers = #tpu.dot_dimension_numbers<[1], [0], [0], [1], [0, 0, 1, 1], [], []>} : vector<44x32xf32>, vector<32x256xf32>, vector<44x256xf32> -> vector<44x256xf32>
    %c0_3 = arith.constant 0 : index
    %c0_4 = arith.constant 0 : index
    %3 = vector.load %arg6[%c0_3, %c0_4] : memref<44x256xf32, #tpu.memory_space<vmem>>, vector<44x256xf32>
    tpu.vector_store %arg6[%c0_3, %c0_4], %2 {strides = array<i32>} : memref<44x256xf32, #tpu.memory_space<vmem>>, vector<44x256xf32>,
    %c0_5 = arith.constant 0 : index
    %c0_6 = arith.constant 0 : index
    %4 = vector.load %arg2[%c0_5, %c0_6] : memref<32x256xf32, #tpu.memory_space<vmem>>, vector<32x256xf32>
    %cst_7 = arith.constant 6.500000e+00 : f32
    %5 = vector.broadcast %cst_7 : f32 to vector<32x256xf32>
    %6 = arith.mulf %4, %5 : vector<32x256xf32>
    %cst_8 = arith.constant 6.500000e+00 : f32
    %7 = vector.broadcast %cst_8 : f32 to vector<32x256xf32>
    %8 = arith.addf %6, %7 : vector<32x256xf32>
    %cst_9 = arith.constant 0.000000e+00 : f32
    %cst_10 = arith.constant 11.999999 : f32
    %9 = vector.broadcast %cst_9 : f32 to vector<32x256xf32>
    %10 = arith.maximumf %9, %8 : vector<32x256xf32>
    %11 = vector.broadcast %cst_10 : f32 to vector<32x256xf32>
    %12 = arith.minimumf %11, %10 : vector<32x256xf32>
    %cst_11 = arith.constant 0.000000e+00 : f32
    %13 = vector.broadcast %cst_11 : f32 to vector<32x256xf32>
    %c0_12 = arith.constant 0 : index
    %c0_13 = arith.constant 0 : index
    %14 = vector.load %arg6[%c0_12, %c0_13] : memref<44x256xf32, #tpu.memory_space<vmem>>, vector<32x256xf32>
    %cst_14 = arith.constant 0.000000e+00 : f32
    %15 = vector.broadcast %cst_14 : f32 to vector<32x256xf32>
    %16 = arith.subf %12, %15 : vector<32x256xf32>
    %17 = math.absf %16 : vector<32x256xf32>
    %cst_15 = arith.constant 1.000000e+00 : f32
    %18 = vector.broadcast %cst_15 : f32 to vector<32x256xf32>
    %19 = arith.subf %18, %17 : vector<32x256xf32>
    %cst_16 = arith.constant 0.000000e+00 : f32
    %20 = vector.broadcast %cst_16 : f32 to vector<32x256xf32>
    %21 = arith.maximumf %19, %20 : vector<32x256xf32>
    %22 = arith.mulf %14, %21 : vector<32x256xf32>
    %23 = arith.addf %13, %22 : vector<32x256xf32>
    %c1 = arith.constant 1 : index
    %c0_17 = arith.constant 0 : index
    %24 = vector.load %arg6[%c1, %c0_17] : memref<44x256xf32, #tpu.memory_space<vmem>>, vector<32x256xf32>
    %cst_18 = arith.constant 1.000000e+00 : f32
    %25 = vector.broadcast %cst_18 : f32 to vector<32x256xf32>
    %26 = arith.subf %12, %25 : vector<32x256xf32>
    %27 = math.absf %26 : vector<32x256xf32>
    %cst_19 = arith.constant 1.000000e+00 : f32
    %28 = vector.broadcast %cst_19 : f32 to vector<32x256xf32>
    %29 = arith.subf %28, %27 : vector<32x256xf32>
    %cst_20 = arith.constant 0.000000e+00 : f32
    %30 = vector.broadcast %cst_20 : f32 to vector<32x256xf32>
    %31 = arith.maximumf %29, %30 : vector<32x256xf32>
    %32 = arith.mulf %24, %31 : vector<32x256xf32>
    %33 = arith.addf %23, %32 : vector<32x256xf32>
    %c2 = arith.constant 2 : index
    %c0_21 = arith.constant 0 : index
    %34 = vector.load %arg6[%c2, %c0_21] : memref<44x256xf32, #tpu.memory_space<vmem>>, vector<32x256xf32>
    %cst_22 = arith.constant 2.000000e+00 : f32
    %35 = vector.broadcast %cst_22 : f32 to vector<32x256xf32>
    %36 = arith.subf %12, %35 : vector<32x256xf32>
    %37 = math.absf %36 : vector<32x256xf32>
    %cst_23 = arith.constant 1.000000e+00 : f32
    %38 = vector.broadcast %cst_23 : f32 to vector<32x256xf32>
    %39 = arith.subf %38, %37 : vector<32x256xf32>
    %cst_24 = arith.constant 0.000000e+00 : f32
    %40 = vector.broadcast %cst_24 : f32 to vector<32x256xf32>
    %41 = arith.maximumf %39, %40 : vector<32x256xf32>
    %42 = arith.mulf %34, %41 : vector<32x256xf32>
    %43 = arith.addf %33, %42 : vector<32x256xf32>
    %c3 = arith.constant 3 : index
    %c0_25 = arith.constant 0 : index
    %44 = vector.load %arg6[%c3, %c0_25] : memref<44x256xf32, #tpu.memory_space<vmem>>, vector<32x256xf32>
    %cst_26 = arith.constant 3.000000e+00 : f32
    %45 = vector.broadcast %cst_26 : f32 to vector<32x256xf32>
    %46 = arith.subf %12, %45 : vector<32x256xf32>
    %47 = math.absf %46 : vector<32x256xf32>
    %cst_27 = arith.constant 1.000000e+00 : f32
    %48 = vector.broadcast %cst_27 : f32 to vector<32x256xf32>
    %49 = arith.subf %48, %47 : vector<32x256xf32>
    %cst_28 = arith.constant 0.000000e+00 : f32
    %50 = vector.broadcast %cst_28 : f32 to vector<32x256xf32>
    %51 = arith.maximumf %49, %50 : vector<32x256xf32>
    %52 = arith.mulf %44, %51 : vector<32x256xf32>
    %53 = arith.addf %43, %52 : vector<32x256xf32>
    %c4 = arith.constant 4 : index
    %c0_29 = arith.constant 0 : index
    %54 = vector.load %arg6[%c4, %c0_29] : memref<44x256xf32, #tpu.memory_space<vmem>>, vector<32x256xf32>
    %cst_30 = arith.constant 4.000000e+00 : f32
    %55 = vector.broadcast %cst_30 : f32 to vector<32x256xf32>
    %56 = arith.subf %12, %55 : vector<32x256xf32>
    %57 = math.absf %56 : vector<32x256xf32>
    %cst_31 = arith.constant 1.000000e+00 : f32
    %58 = vector.broadcast %cst_31 : f32 to vector<32x256xf32>
    %59 = arith.subf %58, %57 : vector<32x256xf32>
    %cst_32 = arith.constant 0.000000e+00 : f32
    %60 = vector.broadcast %cst_32 : f32 to vector<32x256xf32>
    %61 = arith.maximumf %59, %60 : vector<32x256xf32>
    %62 = arith.mulf %54, %61 : vector<32x256xf32>
    %63 = arith.addf %53, %62 : vector<32x256xf32>
    %c5 = arith.constant 5 : index
    %c0_33 = arith.constant 0 : index
    %64 = vector.load %arg6[%c5, %c0_33] : memref<44x256xf32, #tpu.memory_space<vmem>>, vector<32x256xf32>
    %cst_34 = arith.constant 5.000000e+00 : f32
    %65 = vector.broadcast %cst_34 : f32 to vector<32x256xf32>
    %66 = arith.subf %12, %65 : vector<32x256xf32>
    %67 = math.absf %66 : vector<32x256xf32>
    %cst_35 = arith.constant 1.000000e+00 : f32
    %68 = vector.broadcast %cst_35 : f32 to vector<32x256xf32>
    %69 = arith.subf %68, %67 : vector<32x256xf32>
    %cst_36 = arith.constant 0.000000e+00 : f32
    %70 = vector.broadcast %cst_36 : f32 to vector<32x256xf32>
    %71 = arith.maximumf %69, %70 : vector<32x256xf32>
    %72 = arith.mulf %64, %71 : vector<32x256xf32>
    %73 = arith.addf %63, %72 : vector<32x256xf32>
    %c6 = arith.constant 6 : index
    %c0_37 = arith.constant 0 : index
    %74 = vector.load %arg6[%c6, %c0_37] : memref<44x256xf32, #tpu.memory_space<vmem>>, vector<32x256xf32>
    %cst_38 = arith.constant 6.000000e+00 : f32
    %75 = vector.broadcast %cst_38 : f32 to vector<32x256xf32>
    %76 = arith.subf %12, %75 : vector<32x256xf32>
    %77 = math.absf %76 : vector<32x256xf32>
    %cst_39 = arith.constant 1.000000e+00 : f32
    %78 = vector.broadcast %cst_39 : f32 to vector<32x256xf32>
    %79 = arith.subf %78, %77 : vector<32x256xf32>
    %cst_40 = arith.constant 0.000000e+00 : f32
    %80 = vector.broadcast %cst_40 : f32 to vector<32x256xf32>
    %81 = arith.maximumf %79, %80 : vector<32x256xf32>
    %82 = arith.mulf %74, %81 : vector<32x256xf32>
    %83 = arith.addf %73, %82 : vector<32x256xf32>
    %c7 = arith.constant 7 : index
    %c0_41 = arith.constant 0 : index
    %84 = vector.load %arg6[%c7, %c0_41] : memref<44x256xf32, #tpu.memory_space<vmem>>, vector<32x256xf32>
    %cst_42 = arith.constant 7.000000e+00 : f32
    %85 = vector.broadcast %cst_42 : f32 to vector<32x256xf32>
    %86 = arith.subf %12, %85 : vector<32x256xf32>
    %87 = math.absf %86 : vector<32x256xf32>
    %cst_43 = arith.constant 1.000000e+00 : f32
    %88 = vector.broadcast %cst_43 : f32 to vector<32x256xf32>
    %89 = arith.subf %88, %87 : vector<32x256xf32>
    %cst_44 = arith.constant 0.000000e+00 : f32
    %90 = vector.broadcast %cst_44 : f32 to vector<32x256xf32>
    %91 = arith.maximumf %89, %90 : vector<32x256xf32>
    %92 = arith.mulf %84, %91 : vector<32x256xf32>
    %93 = arith.addf %83, %92 : vector<32x256xf32>
    %c8 = arith.constant 8 : index
    %c0_45 = arith.constant 0 : index
    %94 = vector.load %arg6[%c8, %c0_45] : memref<44x256xf32, #tpu.memory_space<vmem>>, vector<32x256xf32>
    %cst_46 = arith.constant 8.000000e+00 : f32
    %95 = vector.broadcast %cst_46 : f32 to vector<32x256xf32>
    %96 = arith.subf %12, %95 : vector<32x256xf32>
    %97 = math.absf %96 : vector<32x256xf32>
    %cst_47 = arith.constant 1.000000e+00 : f32
    %98 = vector.broadcast %cst_47 : f32 to vector<32x256xf32>
    %99 = arith.subf %98, %97 : vector<32x256xf32>
    %cst_48 = arith.constant 0.000000e+00 : f32
    %100 = vector.broadcast %cst_48 : f32 to vector<32x256xf32>
    %101 = arith.maximumf %99, %100 : vector<32x256xf32>
    %102 = arith.mulf %94, %101 : vector<32x256xf32>
    %103 = arith.addf %93, %102 : vector<32x256xf32>
    %c9 = arith.constant 9 : index
    %c0_49 = arith.constant 0 : index
    %104 = vector.load %arg6[%c9, %c0_49] : memref<44x256xf32, #tpu.memory_space<vmem>>, vector<32x256xf32>
    %cst_50 = arith.constant 9.000000e+00 : f32
    %105 = vector.broadcast %cst_50 : f32 to vector<32x256xf32>
    %106 = arith.subf %12, %105 : vector<32x256xf32>
    %107 = math.absf %106 : vector<32x256xf32>
    %cst_51 = arith.constant 1.000000e+00 : f32
    %108 = vector.broadcast %cst_51 : f32 to vector<32x256xf32>
    %109 = arith.subf %108, %107 : vector<32x256xf32>
    %cst_52 = arith.constant 0.000000e+00 : f32
    %110 = vector.broadcast %cst_52 : f32 to vector<32x256xf32>
    %111 = arith.maximumf %109, %110 : vector<32x256xf32>
    %112 = arith.mulf %104, %111 : vector<32x256xf32>
    %113 = arith.addf %103, %112 : vector<32x256xf32>
    %c10 = arith.constant 10 : index
    %c0_53 = arith.constant 0 : index
    %114 = vector.load %arg6[%c10, %c0_53] : memref<44x256xf32, #tpu.memory_space<vmem>>, vector<32x256xf32>
    %cst_54 = arith.constant 1.000000e+01 : f32
    %115 = vector.broadcast %cst_54 : f32 to vector<32x256xf32>
    %116 = arith.subf %12, %115 : vector<32x256xf32>
    %117 = math.absf %116 : vector<32x256xf32>
    %cst_55 = arith.constant 1.000000e+00 : f32
    %118 = vector.broadcast %cst_55 : f32 to vector<32x256xf32>
    %119 = arith.subf %118, %117 : vector<32x256xf32>
    %cst_56 = arith.constant 0.000000e+00 : f32
    %120 = vector.broadcast %cst_56 : f32 to vector<32x256xf32>
    %121 = arith.maximumf %119, %120 : vector<32x256xf32>
    %122 = arith.mulf %114, %121 : vector<32x256xf32>
    %123 = arith.addf %113, %122 : vector<32x256xf32>
    %c11 = arith.constant 11 : index
    %c0_57 = arith.constant 0 : index
    %124 = vector.load %arg6[%c11, %c0_57] : memref<44x256xf32, #tpu.memory_space<vmem>>, vector<32x256xf32>
    %cst_58 = arith.constant 1.100000e+01 : f32
    %125 = vector.broadcast %cst_58 : f32 to vector<32x256xf32>
    %126 = arith.subf %12, %125 : vector<32x256xf32>
    %127 = math.absf %126 : vector<32x256xf32>
    %cst_59 = arith.constant 1.000000e+00 : f32
    %128 = vector.broadcast %cst_59 : f32 to vector<32x256xf32>
    %129 = arith.subf %128, %127 : vector<32x256xf32>
    %cst_60 = arith.constant 0.000000e+00 : f32
    %130 = vector.broadcast %cst_60 : f32 to vector<32x256xf32>
    %131 = arith.maximumf %129, %130 : vector<32x256xf32>
    %132 = arith.mulf %124, %131 : vector<32x256xf32>
    %133 = arith.addf %123, %132 : vector<32x256xf32>
    %c12 = arith.constant 12 : index
    %c0_61 = arith.constant 0 : index
    %134 = vector.load %arg6[%c12, %c0_61] : memref<44x256xf32, #tpu.memory_space<vmem>>, vector<32x256xf32>
    %cst_62 = arith.constant 1.200000e+01 : f32
    %135 = vector.broadcast %cst_62 : f32 to vector<32x256xf32>
    %136 = arith.subf %12, %135 : vector<32x256xf32>
    %137 = math.absf %136 : vector<32x256xf32>
    %cst_63 = arith.constant 1.000000e+00 : f32
    %138 = vector.broadcast %cst_63 : f32 to vector<32x256xf32>
    %139 = arith.subf %138, %137 : vector<32x256xf32>
    %cst_64 = arith.constant 0.000000e+00 : f32
    %140 = vector.broadcast %cst_64 : f32 to vector<32x256xf32>
    %141 = arith.maximumf %139, %140 : vector<32x256xf32>
    %142 = arith.mulf %134, %141 : vector<32x256xf32>
    %143 = arith.addf %133, %142 : vector<32x256xf32>
    %c0_65 = arith.constant 0 : index
    %c0_66 = arith.constant 0 : index
    %144 = vector.load %arg4[%c0_65, %c0_66] : memref<32x4xf32, #tpu.memory_space<vmem>>, vector<32x4xf32>
    %145 = vector.extract_strided_slice %144 {offsets = [0, 3], sizes = [32, 1], strides = [1, 1]} : vector<32x4xf32> to vector<32x1xf32>
    %146 = vector.broadcast %145 : vector<32x1xf32> to vector<32x256xf32>
    %147 = arith.mulf %146, %143 : vector<32x256xf32>
    %148 = vector.extract_strided_slice %144 {offsets = [0, 2], sizes = [32, 1], strides = [1, 1]} : vector<32x4xf32> to vector<32x1xf32>
    %149 = vector.broadcast %148 : vector<32x1xf32> to vector<32x256xf32>
    %150 = arith.addf %147, %149 : vector<32x256xf32>
    %151 = arith.mulf %150, %143 : vector<32x256xf32>
    %152 = vector.extract_strided_slice %144 {offsets = [0, 1], sizes = [32, 1], strides = [1, 1]} : vector<32x4xf32> to vector<32x1xf32>
    %153 = vector.broadcast %152 : vector<32x1xf32> to vector<32x256xf32>
    %154 = arith.addf %151, %153 : vector<32x256xf32>
    %155 = arith.mulf %154, %143 : vector<32x256xf32>
    %156 = vector.extract_strided_slice %144 {offsets = [0, 0], sizes = [32, 1], strides = [1, 1]} : vector<32x4xf32> to vector<32x1xf32>
    %157 = vector.broadcast %156 : vector<32x1xf32> to vector<32x256xf32>
    %158 = arith.addf %155, %157 : vector<32x256xf32>
    %159 = arith.addf %143, %158 : vector<32x256xf32>
    %c0_67 = arith.constant 0 : index
    %c0_68 = arith.constant 0 : index
    %160 = vector.load %arg5[%c0_67, %c0_68] : memref<32x256xf32, #tpu.memory_space<vmem>>, vector<32x256xf32>
    tpu.vector_store %arg5[%c0_67, %c0_68], %159 {strides = array<i32>} : memref<32x256xf32, #tpu.memory_space<vmem>>, vector<32x256xf32>,
    return
  }
  func.func @transform_0(%arg0: i32) -> (i32, i32) {
    %c0_i32 = arith.constant 0 : i32
    %c0_i32_0 = arith.constant 0 : i32
    return %c0_i32, %arg0 : i32, i32
  }
  func.func @transform_1(%arg0: i32) -> (i32, i32) {
    %c0_i32 = arith.constant 0 : i32
    %c0_i32_0 = arith.constant 0 : i32
    return %c0_i32, %arg0 : i32, i32
  }
  func.func @transform_2(%arg0: i32) -> (i32, i32) {
    %c0_i32 = arith.constant 0 : i32
    %c0_i32_0 = arith.constant 0 : i32
    %c0_i32_1 = arith.constant 0 : i32
    return %c0_i32, %c0_i32_0 : i32, i32
  }
  func.func @transform_3(%arg0: i32) -> (i32, i32) {
    %c0_i32 = arith.constant 0 : i32
    %c0_i32_0 = arith.constant 0 : i32
    %c0_i32_1 = arith.constant 0 : i32
    return %c0_i32, %c0_i32_0 : i32, i32
  }
  func.func @transform_4(%arg0: i32) -> (i32, i32) {
    %c0_i32 = arith.constant 0 : i32
    %c0_i32_0 = arith.constant 0 : i32
    return %c0_i32, %arg0 : i32, i32
  }
}

</mosaic_0001>

<llo_original>
// kernel: fwd.1
$region0: #{fwd.1}
  #allocation0 [shape = 'u32[]', space=smem, size = 0x4, offset = 0x4, fixed_abs, tag = 'smem constant byte address 0x4 - core index']
  #allocation1 [shape = 'u32[144,128]{1,0:T(1,128)}', space=vmem, size = 0x12000, scoped, tag = 'internal scratch']
  #allocation2 [shape = 'f32[44,256]{1,0:T(8,128)}', space=vmem, size = 0xc000, scoped, tag = 'scratch operand']
  %s0 = inlined_call_operand.vmem [shape: f32[32,1024], index: 0, kind: input, shape index: {}]
  %s1 = inlined_call_operand.vmem [shape: f32[32,1024], index: 1, kind: input, shape index: {}]
  %s2 = inlined_call_operand.vmem [shape: f32[44,32], index: 2, kind: input, shape index: {}]
  %s3 = inlined_call_operand.vmem [shape: f32[32,4], index: 3, kind: input, shape index: {}]
  %s4 = inlined_call_operand.hbm [shape: f32[32,1024], index: 4, kind: output, shape index: {}]
  %s5 = sld [smem:[#allocation0]]
  $region95: #{fwd.1} parent=0
    _
  %s7 = ssub.s32 1, %s5
  %s8 = scalar_select 0, %s7, %s5
  $region1: #{fwd.1} parent=0
    #allocation3 [shape = 'u8[65536]{0}', space=vmem, size = 0x10000, scoped, tag = 'input window, operand 0']
    #allocation4 [shape = 'u8[65536]{0}', space=vmem, size = 0x10000, scoped, tag = 'input window, operand 1']
    #allocation5 [shape = 'u8[65536]{0}', space=vmem, size = 0x10000, scoped, tag = 'output window, operand 0']
    #allocation6 [shape = 's32[2]{0}', space=sflag, size = 0x8, scoped, tag = 'scoped memory for fwd.1']
    %9 = vsyncpa [#allocation6], 0
    %s10 = scalar_lea.sflag [#allocation6], 1
    %11 = vsyncpa %s10, 0
    loop: start=0, step=1, limit=6
    $region2: #{fwd.1} parent=1 // loop_pre_header
      _
    $region3: #{fwd.1} parent=1 // loop_header
      %s13 = sphi 0, %s17
      %p14 = scmp.ge.s32.totalorder %s13, 6
      %s23 = sphi 0, %s25
      %s26 = sphi 0, %s23
      %s27 = sphi 0, %s26
      %s43 = sphi 0, %s27
      %s49 = sphi 0, %s51
      %s52 = sphi 0, %s49
      %s53 = sphi 0, %s52
      %s69 = sphi 0, %s53
      %s73 = sphi 0, %s73
      %s75 = sphi 0, %s73
      %s76 = sphi 0, %s75
      %s90 = sphi 0, %s76
      %s94 = sphi 0, %s94
      %s96 = sphi 0, %s94
      %s97 = sphi 0, %s96
      %s111 = sphi 0, %s97
      %s117 = sphi 0, %s119
      %s120 = sphi 0, %s117
      %s121 = sphi 0, %s120
      %s137 = sphi 0, %s121
    $region4: #{fwd.1} parent=1 // loop_header_branch
      %16 = sbr.rel (%p14) target = $region8
    $region5: #{fwd.1} parent=1 // loop_body
      %s18 = ssub.s32 %s13, 1
      %s19 = ssub.s32 %s13, 2
      %s20 = sadd.s32 %s13, 1
      %s21 = ssub.s32 %s13, %s20
      %p22 = scmp.eq.s32.totalorder %s21, 0
      %s24 = sadd.s32 %s23, 1
      %s25 = scalar_select %p22, %s23, %s24
      %p28 = pneg %p22
      %p29 = scmp.eq.s32.totalorder %s13, 3
      %p30 = por %p28, %p29
      %p31 = scmp.ne.s32.totalorder %s23, %s26
      %p32 = scmp.eq.s32.totalorder %s13, 0
      %p33 = por %p31, %p32
      %p34 = scmp.ne.s32.totalorder %s23, %s26
      %p35 = scmp.eq.s32.totalorder %s18, 3
      %p36 = por %p34, %p35
      %p37 = scmp.ne.s32.totalorder %s26, %s27
      %p38 = scmp.eq.s32.totalorder %s18, 0
      %p39 = por %p37, %p38
      %p40 = scmp.ne.s32.totalorder %s26, %s27
      %p41 = scmp.eq.s32.totalorder %s19, 3
      %p42 = por %p40, %p41
      %p44 = scmp.ne.s32.totalorder %s27, %s43
      %p45 = scmp.eq.s32.totalorder %s19, 0
      %p46 = por %p44, %p45
      %s47 = ssub.s32 %s13, %s20
      %p48 = scmp.eq.s32.totalorder %s47, 0
      %s50 = sadd.s32 %s49, 1
      %s51 = scalar_select %p48, %s49, %s50
      %p54 = pneg %p48
      %p55 = scmp.eq.s32.totalorder %s13, 3
      %p56 = por %p54, %p55
      %p57 = scmp.ne.s32.totalorder %s49, %s52
      %p58 = scmp.eq.s32.totalorder %s13, 0
      %p59 = por %p57, %p58
      %p60 = scmp.ne.s32.totalorder %s49, %s52
      %p61 = scmp.eq.s32.totalorder %s18, 3
      %p62 = por %p60, %p61
      %p63 = scmp.ne.s32.totalorder %s52, %s53
      %p64 = scmp.eq.s32.totalorder %s18, 0
      %p65 = por %p63, %p64
      %p66 = scmp.ne.s32.totalorder %s52, %s53
      %p67 = scmp.eq.s32.totalorder %s19, 3
      %p68 = por %p66, %p67
      %p70 = scmp.ne.s32.totalorder %s53, %s69
      %p71 = scmp.eq.s32.totalorder %s19, 0
      %p72 = por %p70, %p71
      %s74 = sadd.s32 %s73, 1
      %p77 = scmp.eq.s32.totalorder %s13, 3
      %p78 = scmp.ne.s32.totalorder %s73, %s75
      %p79 = scmp.eq.s32.totalorder %s13, 0
      %p80 = por %p78, %p79
      %p81 = scmp.ne.s32.totalorder %s73, %s75
      %p82 = scmp.eq.s32.totalorder %s18, 3
      %p83 = por %p81, %p82
      %p84 = scmp.ne.s32.totalorder %s75, %s76
      %p85 = scmp.eq.s32.totalorder %s18, 0
      %p86 = por %p84, %p85
      %p87 = scmp.ne.s32.totalorder %s75, %s76
      %p88 = scmp.eq.s32.totalorder %s19, 3
      %p89 = por %p87, %p88
      %p91 = scmp.ne.s32.totalorder %s76, %s90
      %p92 = scmp.eq.s32.totalorder %s19, 0
      %p93 = por %p91, %p92
      %s95 = sadd.s32 %s94, 1
      %p98 = scmp.eq.s32.totalorder %s13, 3
      %p99 = scmp.ne.s32.totalorder %s94, %s96
      %p100 = scmp.eq.s32.totalorder %s13, 0
      %p101 = por %p99, %p100
      %p102 = scmp.ne.s32.totalorder %s94, %s96
      %p103 = scmp.eq.s32.totalorder %s18, 3
      %p104 = por %p102, %p103
      %p105 = scmp.ne.s32.totalorder %s96, %s97
      %p106 = scmp.eq.s32.totalorder %s18, 0
      %p107 = por %p105, %p106
      %p108 = scmp.ne.s32.totalorder %s96, %s97
      %p109 = scmp.eq.s32.totalorder %s19, 3
      %p110 = por %p108, %p109
      %p112 = scmp.ne.s32.totalorder %s97, %s111
      %p113 = scmp.eq.s32.totalorder %s19, 0
      %p114 = por %p112, %p113
      %s115 = ssub.s32 %s13, %s20
      %p116 = scmp.eq.s32.totalorder %s115, 0
      %s118 = sadd.s32 %s117, 1
      %s119 = scalar_select %p116, %s117, %s118
      %p122 = pneg %p116
      %p123 = scmp.eq.s32.totalorder %s13, 3
      %p124 = por %p122, %p123
      %p125 = scmp.ne.s32.totalorder %s117, %s120
      %p126 = scmp.eq.s32.totalorder %s13, 0
      %p127 = por %p125, %p126
      %p128 = scmp.ne.s32.totalorder %s117, %s120
      %p129 = scmp.eq.s32.totalorder %s18, 3
      %p130 = por %p128, %p129
      %p131 = scmp.ne.s32.totalorder %s120, %s121
      %p132 = scmp.eq.s32.totalorder %s18, 0
      %p133 = por %p131, %p132
      %p134 = scmp.ne.s32.totalorder %s120, %s121
      %p135 = scmp.eq.s32.totalorder %s19, 3
      %p136 = por %p134, %p135
      %p138 = scmp.ne.s32.totalorder %s121, %s137
      %p139 = scmp.eq.s32.totalorder %s19, 0
      %p140 = por %p138, %p139
      %p141 = scmp.le.s32.totalorder 1, %s13
      %p142 = scmp.lt.s32.totalorder %s13, 5
      %p143 = pnand %p141, %p142
      %p144 = pneg %p143
      // Predicated region
      $region9: #{fwd.1} parent=5 // pred_check
        _
      $region10: #{fwd.1} parent=5 // pred_check_branch
        %146 = sbr.rel (%p143) target = $region12
      $region11: #{fwd.1} parent=5 // pred_region
        %s147 = ssub.s32 %s13, 1
        // Predicated region
        $region13: #{fwd.1} parent=11 // pred_check
          %p148 = pneg %p86
        $region14: #{fwd.1} parent=11 // pred_check_branch
          %150 = sbr.rel (%p148) target = $region16
        $region15: #{fwd.1} parent=11 // pred_region
          _
        $region16: #{fwd.1} parent=11 // pred_fallthru
          _
        // Predicated region
        $region17: #{fwd.1} parent=11 // pred_check
          %p151 = pneg %p107
        $region18: #{fwd.1} parent=11 // pred_check_branch
          %153 = sbr.rel (%p151) target = $region20
        $region19: #{fwd.1} parent=11 // pred_region
          _
        $region20: #{fwd.1} parent=11 // pred_fallthru
          _
      $region12: #{fwd.1} parent=5 // pred_fallthru
        _
      %p154 = scmp.lt.s32.totalorder %s13, 4
      // Predicated region
      $region21: #{fwd.1} parent=5 // pred_check
        %p155 = pneg %p154
      $region22: #{fwd.1} parent=5 // pred_check_branch
        %157 = sbr.rel (%p155) target = $region24
      $region23: #{fwd.1} parent=5 // pred_region
        // Predicated region
        $region25: #{fwd.1} parent=23 // pred_check
          %p158 = pneg %p33
        $region26: #{fwd.1} parent=23 // pred_check_branch
          %160 = sbr.rel (%p158) target = $region28
        $region27: #{fwd.1} parent=23 // pred_region
          %s161 = sand.u32 %s23, 1
          %s162 = sand.u32 %s23, 1
          %s163 = smul.addr %s162, 64
          %s164 = scalar_lea.vmem [#allocation3], %s163
          %s165 = smul.u32 2, %s13
          %s166 = smul.addr %s165, 8
          %s167 = scalar_lea.vmem %s0, %s166
          // Predicated region
          $region29: #{fwd.1} parent=27 // pred_check
            _
          $region30: #{fwd.1} parent=27 // pred_check_branch
            %169 = sbr.rel (0) target = $region32
          $region31: #{fwd.1} parent=27 // pred_region
            // Predicated region
            $region33: #{fwd.1} parent=31 // pred_check
              _
            $region34: #{fwd.1} parent=31 // pred_check_branch
              %171 = sbr.rel (0) target = $region36
            $region35: #{fwd.1} parent=31 // pred_region
              loop: start=0, step=1, limit=1
              $region37: #{fwd.1} parent=35 // loop_pre_header
                _
              $region38: #{fwd.1} parent=35 // loop_header
                %s173 = sphi 0, %s177
                %p174 = scmp.ge.s32.totalorder %s173, 1
                %s178 = sphi %s167, %s167
                %s179 = sphi %s164, %s164
              $region39: #{fwd.1} parent=35 // loop_header_branch
                %176 = sbr.rel (%p174) target = $region43
              $region40: #{fwd.1} parent=35 // loop_body
                %v180 = vld [vmem:[%s178] sm:$0xff]
                %181 = vst [vmem:[%s179] sm:$0xff] %v180
                %v182 = vld [vmem:[%s178 + $0x8] sm:$0xff]
                %183 = vst [vmem:[%s179 + $0x8] sm:$0xff] %v182
                %v184 = vld [vmem:[%s178 + $0x40] sm:$0xff]
                %185 = vst [vmem:[%s179 + $0x10] sm:$0xff] %v184
                %v186 = vld [vmem:[%s178 + $0x48] sm:$0xff]
                %187 = vst [vmem:[%s179 + $0x18] sm:$0xff] %v186
                %v188 = vld [vmem:[%s178 + $0x80] sm:$0xff]
                %189 = vst [vmem:[%s179 + $0x20] sm:$0xff] %v188
                %v190 = vld [vmem:[%s178 + $0x88] sm:$0xff]
                %191 = vst [vmem:[%s179 + $0x28] sm:$0xff] %v190
                %v192 = vld [vmem:[%s178 + $0xc0] sm:$0xff]
                %193 = vst [vmem:[%s179 + $0x30] sm:$0xff] %v192
                %v194 = vld [vmem:[%s178 + $0xc8] sm:$0xff]
                %195 = vst [vmem:[%s179 + $0x38] sm:$0xff] %v194
              $region41: #{fwd.1} parent=35 // loop_footer
                %s177 = sadd.s32 1, %s173
              $region42: #{fwd.1} parent=35 // loop_footer_branch
                %172 = sbr.rel target = $region38
              $region43: #{fwd.1} parent=35 // loop_exit
                _
            $region36: #{fwd.1} parent=31 // pred_fallthru
              _
            // Predicated region
            $region44: #{fwd.1} parent=31 // pred_check
              _
            $region45: #{fwd.1} parent=31 // pred_check_branch
              %197 = sbr.rel target = $region47
            $region46: #{fwd.1} parent=31 // pred_region
              _
            $region47: #{fwd.1} parent=31 // pred_fallthru
              _
          $region32: #{fwd.1} parent=27 // pred_fallthru
            _
          %198 = vnop
        $region28: #{fwd.1} parent=23 // pred_fallthru
          _
        // Predicated region
        $region48: #{fwd.1} parent=23 // pred_check
          %p199 = pneg %p59
        $region49: #{fwd.1} parent=23 // pred_check_branch
          %201 = sbr.rel (%p199) target = $region51
        $region50: #{fwd.1} parent=23 // pred_region
          %s202 = sand.u32 %s49, 1
          %s203 = sand.u32 %s49, 1
          %s204 = smul.addr %s203, 64
          %s205 = scalar_lea.vmem [#allocation4], %s204
          %s206 = smul.u32 2, %s13
          %s207 = smul.addr %s206, 8
          %s208 = scalar_lea.vmem %s1, %s207
          // Predicated region
          $region52: #{fwd.1} parent=50 // pred_check
            _
          $region53: #{fwd.1} parent=50 // pred_check_branch
            %210 = sbr.rel (0) target = $region55
          $region54: #{fwd.1} parent=50 // pred_region
            // Predicated region
            $region56: #{fwd.1} parent=54 // pred_check
              _
            $region57: #{fwd.1} parent=54 // pred_check_branch
              %212 = sbr.rel (0) target = $region59
            $region58: #{fwd.1} parent=54 // pred_region
              loop: start=0, step=1, limit=1
              $region60: #{fwd.1} parent=58 // loop_pre_header
                _
              $region61: #{fwd.1} parent=58 // loop_header
                %s214 = sphi 0, %s218
                %p215 = scmp.ge.s32.totalorder %s214, 1
                %s219 = sphi %s208, %s208
                %s220 = sphi %s205, %s205
              $region62: #{fwd.1} parent=58 // loop_header_branch
                %217 = sbr.rel (%p215) target = $region66
              $region63: #{fwd.1} parent=58 // loop_body
                %v221 = vld [vmem:[%s219] sm:$0xff]
                %222 = vst [vmem:[%s220] sm:$0xff] %v221
                %v223 = vld [vmem:[%s219 + $0x8] sm:$0xff]
                %224 = vst [vmem:[%s220 + $0x8] sm:$0xff] %v223
                %v225 = vld [vmem:[%s219 + $0x40] sm:$0xff]
                %226 = vst [vmem:[%s220 + $0x10] sm:$0xff] %v225
                %v227 = vld [vmem:[%s219 + $0x48] sm:$0xff]
                %228 = vst [vmem:[%s220 + $0x18] sm:$0xff] %v227
                %v229 = vld [vmem:[%s219 + $0x80] sm:$0xff]
                %230 = vst [vmem:[%s220 + $0x20] sm:$0xff] %v229
                %v231 = vld [vmem:[%s219 + $0x88] sm:$0xff]
                %232 = vst [vmem:[%s220 + $0x28] sm:$0xff] %v231
                %v233 = vld [vmem:[%s219 + $0xc0] sm:$0xff]
                %234 = vst [vmem:[%s220 + $0x30] sm:$0xff] %v233
                %v235 = vld [vmem:[%s219 + $0xc8] sm:$0xff]
                %236 = vst [vmem:[%s220 + $0x38] sm:$0xff] %v235
              $region64: #{fwd.1} parent=58 // loop_footer
                %s218 = sadd.s32 1, %s214
              $region65: #{fwd.1} parent=58 // loop_footer_branch
                %213 = sbr.rel target = $region61
              $region66: #{fwd.1} parent=58 // loop_exit
                _
            $region59: #{fwd.1} parent=54 // pred_fallthru
              _
            // Predicated region
            $region67: #{fwd.1} parent=54 // pred_check
              _
            $region68: #{fwd.1} parent=54 // pred_check_branch
              %238 = sbr.rel target = $region70
            $region69: #{fwd.1} parent=54 // pred_region
              _
            $region70: #{fwd.1} parent=54 // pred_fallthru
              _
          $region55: #{fwd.1} parent=50 // pred_fallthru
            _
          %239 = vnop
        $region51: #{fwd.1} parent=23 // pred_fallthru
          _
      $region24: #{fwd.1} parent=5 // pred_fallthru
        _
      %p240 = scmp.le.s32.totalorder 1, %s13
      %p241 = scmp.lt.s32.totalorder %s13, 5
      %p242 = pnand %p240, %p241
      %p243 = pneg %p242
      // Predicated region
      $region71: #{fwd.1} parent=5 // pred_check
        _
      $region72: #{fwd.1} parent=5 // pred_check_branch
        %245 = sbr.rel (%p242) target = $region74
      $region73: #{fwd.1} parent=5 // pred_region
        %s246 = ssub.s32 %s13, 1
        %s247 = sand.u32 %s26, 1
        %s248 = sand.u32 %s26, 1
        %s249 = smul.addr %s248, 64
        %s250 = scalar_lea.vmem [#allocation3], %s249
        // Predicated region
        $region75: #{fwd.1} parent=73 // pred_check
          %p251 = pneg %p39
        $region76: #{fwd.1} parent=73 // pred_check_branch
          %253 = sbr.rel (%p251) target = $region78
        $region77: #{fwd.1} parent=73 // pred_region
          _
        $region78: #{fwd.1} parent=73 // pred_fallthru
          _
        %s254 = sand.u32 %s52, 1
        %s255 = sand.u32 %s52, 1
        %s256 = smul.addr %s255, 64
        %s257 = scalar_lea.vmem [#allocation4], %s256
        // Predicated region
        $region79: #{fwd.1} parent=73 // pred_check
          %p258 = pneg %p65
        $region80: #{fwd.1} parent=73 // pred_check_branch
          %260 = sbr.rel (%p258) target = $region82
        $region81: #{fwd.1} parent=73 // pred_region
          _
        $region82: #{fwd.1} parent=73 // pred_fallthru
          _
        %s261 = sand.u32 %s26, 1
        %s262 = sand.u32 %s26, 1
        %s263 = smul.addr %s262, 64
        %s264 = scalar_lea.vmem [#allocation3], %s263
        %p265 = pneg %p39
        %p266 = pneg %p36
        %s267 = sand.u32 %s52, 1
        %s268 = sand.u32 %s52, 1
        %s269 = smul.addr %s268, 64
        %s270 = scalar_lea.vmem [#allocation4], %s269
        %p271 = pneg %p65
        %p272 = pneg %p62
        %p273 = pneg %p86
        %p274 = pneg %p83
        %p275 = pneg %p107
        %p276 = pneg %p104
        %p277 = pneg %p133
        %p278 = pneg %p130
        %s279 = sand.u32 %s120, 1
        %s280 = scalar_lea.sflag [#allocation6], %s279
        %s281 = sand.u32 %s120, 1
        %s282 = smul.addr %s281, 64
        %s283 = scalar_lea.vmem [#allocation5], %s282
        %s284 = smul.u32 2, %s18
        %s285 = smul.u32 2, %s18
        %s286 = smul.u32 2, %s18
        %v287 = vld [vmem:[%s2] sm:$0xff]
        %v288 = vld [vmem:[%s2 + $0x8] sm:$0xff]
        %v289 = vld [vmem:[%s2 + $0x10] sm:$0xff]
        %v290 = vld [vmem:[%s2 + $0x18] sm:$0xff]
        %v291 = vld [vmem:[%s2 + $0x20] sm:$0xff]
        %v292 = vld [vmem:[%s2 + $0x28] sm:$0xf]
        %v293 = vld [vmem:[%s250] sm:$0xff]
        %v294 = vld [vmem:[%s250 + $0x8] sm:$0xff]
        %v295 = vld [vmem:[%s250 + $0x10] sm:$0xff]
        %v296 = vld [vmem:[%s250 + $0x18] sm:$0xff]
        %v297 = vld [vmem:[%s250 + $0x20] sm:$0xff]
        %v298 = vld [vmem:[%s250 + $0x28] sm:$0xff]
        %v299 = vld [vmem:[%s250 + $0x30] sm:$0xff]
        %v300 = vld [vmem:[%s250 + $0x38] sm:$0xff]
        %vm301 = vcmask 261120
        %v303 = vsel %vm301, %v287, 0
        %v306 = vsel %vm301, %v288, 0
        %v309 = vsel %vm301, %v289, 0
        %v312 = vsel %vm301, %v290, 0
        %v315 = vsel %vm301, %v291, 0
        %v318 = vsel %vm301, %v292, 0
        %320 = vmatprep.subr.mxu0 %v294
        %321 = vmatpush1.msra.mxu0 %v293
        %322 = vmatprep.subr.mxu0 %v296
        %323 = vmatpush1.msra.mxu0 %v295
        %324 = vmatprep.subr.mxu0 %v298
        %325 = vmatpush1.msra.mxu0 %v297
        %326 = vmatprep.subr.mxu0 %v300
        %327 = vmatpush1.msra.mxu0 %v299
        %328 = vmatprep.subr.mxu0 0.0
        %329 = vmatpush1.msra.mxu0 0.0
        %330 = vmatprep.subr.mxu0 0.0
        %331 = vmatpush1.msra.mxu0 0.0
        %332 = vmatprep.subr.mxu0 0.0
        %333 = vmatpush1.msra.mxu0 0.0
        %334 = vmatprep.subr.mxu0 0.0
        %335 = vmatpush1.msra.mxu0 0.0
        %336 = vmatprep.subr.mxu0 0.0
        %337 = vmatpush1.msra.mxu0 0.0
        %338 = vmatprep.subr.mxu0 0.0
        %339 = vmatpush1.msra.mxu0 0.0
        %340 = vmatprep.subr.mxu0 0.0
        %341 = vmatpush1.msra.mxu0 0.0
        %342 = vmatprep.subr.mxu0 0.0
        %343 = vmatpush1.msra.mxu0 0.0
        %344 = vmatprep.subr.mxu0 0.0
        %345 = vmatpush1.msra.mxu0 0.0
        %346 = vmatprep.subr.mxu0 0.0
        %347 = vmatpush1.msra.mxu0 0.0
        %348 = vmatprep.subr.mxu0 0.0
        %349 = vmatpush1.msra.mxu0 0.0
        %350 = vmatprep.subr.mxu0 0.0
        %351 = vmatpush1.msra.mxu0 0.0
        %352 = vmatprep.subr.mxu0 0.0
        %353 = vmatpush1.msra.mxu0 0.0
        %354 = vmatprep.subr.mxu0 0.0
        %355 = vmatpush1.msra.mxu0 0.0
        %356 = vmatprep.subr.mxu0 0.0
        %357 = vmatpush1.msra.mxu0 0.0
        %358 = vmatprep.subr.mxu0 0.0
        %359 = vmatpush1.msra.mxu0 0.0
        %360 = vmatprep.subr.mxu0 0.0
        %361 = vmatpush1.msra.mxu0 0.0
        %362 = vmatprep.subr.mxu0 0.0
        %363 = vmatpush1.msra.mxu0 0.0
        %364 = vmatprep.subr.mxu0 0.0
        %365 = vmatpush1.msra.mxu0 0.0
        %366 = vmatprep.subr.mxu0 0.0
        %367 = vmatpush1.msra.mxu0 0.0
        %368 = vmatprep.subr.mxu0 0.0
        %369 = vmatpush1.msra.mxu0 0.0
        %370 = vmatprep.subr.mxu0 0.0
        %371 = vmatpush1.msra.mxu0 0.0
        %372 = vmatprep.subr.mxu0 0.0
        %373 = vmatpush1.msra.mxu0 0.0
        %374 = vmatprep.subr.mxu0 0.0
        %375 = vmatpush1.msra.mxu0 0.0
        %376 = vmatprep.subr.mxu0 0.0
        %377 = vmatpush1.msra.mxu0 0.0
        %378 = vmatprep.subr.mxu0 0.0
        %379 = vmatpush1.msra.mxu0 0.0
        %380 = vmatprep.subr.mxu0 0.0
        %381 = vmatpush1.msra.mxu0 0.0
        %382 = vmatprep.subr.mxu0 0.0
        %383 = vmatpush1.msra.mxu0 0.0
        %384 = vmatprep.mubr.f32.mxu0 0.0
        %385 = vmatmul.mubr.f32.gmra.mrb[0].mxu0 %v303
        %v386 = vpop.f32.mrb[0].mxu0
        %v387 = vadd.f32 0.0, %v386
        %v388 = vpop.f32.mrb[0].mxu0
        %v389 = vadd.f32 0.0, %v388
        %390 = vmatprep.mubr.f32.mxu0 0.0
        %391 = vmatmul.mubr.f32.gmra.mrb[0].mxu0 %v306
        %v392 = vpop.f32.mrb[0].mxu0
        %v393 = vadd.f32 0.0, %v392
        %v394 = vpop.f32.mrb[0].mxu0
        %v395 = vadd.f32 0.0, %v394
        %396 = vmatprep.mubr.f32.mxu0 0.0
        %397 = vmatmul.mubr.f32.gmra.mrb[0].mxu0 %v309
        %v398 = vpop.f32.mrb[0].mxu0
        %v399 = vadd.f32 0.0, %v398
        %v400 = vpop.f32.mrb[0].mxu0
        %v401 = vadd.f32 0.0, %v400
        %402 = vmatprep.mubr.f32.mxu0 0.0
        %403 = vmatmul.mubr.f32.gmra.mrb[0].mxu0 %v312
        %v404 = vpop.f32.mrb[0].mxu0
        %v405 = vadd.f32 0.0, %v404
        %v406 = vpop.f32.mrb[0].mxu0
        %v407 = vadd.f32 0.0, %v406
        %408 = vmatprep.mubr.f32.mxu0 0.0
        %409 = vmatmul.mubr.f32.gmra.mrb[0].mxu0 %v315
        %v410 = vpop.f32.mrb[0].mxu0
        %v411 = vadd.f32 0.0, %v410
        %v412 = vpop.f32.mrb[0].mxu0
        %v413 = vadd.f32 0.0, %v412
        %414 = vmatprep.mubr.f32.mxu0 0.0
        %415 = vmatmul.mubr.f32.gmra.mrb[0].mxu0 %v318
        %v416 = vpop.f32.mrb[0].mxu0
        %v417 = vadd.f32 0.0, %v416
        %v418 = vpop.f32.mrb[0].mxu0
        %v419 = vadd.f32 0.0, %v418
        %420 = vdwg.mxu0
        %421 = vst [vmem:[#allocation2] sm:$0xff] %v387
        %422 = vst [vmem:[#allocation2 + $0x8] sm:$0xff] %v389
        %423 = vst [vmem:[#allocation2 + $0x10] sm:$0xff] %v393
        %424 = vst [vmem:[#allocation2 + $0x18] sm:$0xff] %v395
        %425 = vst [vmem:[#allocation2 + $0x20] sm:$0xff] %v399
        %426 = vst [vmem:[#allocation2 + $0x28] sm:$0xff] %v401
        %427 = vst [vmem:[#allocation2 + $0x30] sm:$0xff] %v405
        %428 = vst [vmem:[#allocation2 + $0x38] sm:$0xff] %v407
        %429 = vst [vmem:[#allocation2 + $0x40] sm:$0xff] %v411
        %430 = vst [vmem:[#allocation2 + $0x48] sm:$0xff] %v413
        %431 = vst [vmem:[#allocation2 + $0x50] sm:$0xf] %v417
        %432 = vst [vmem:[#allocation2 + $0x58] sm:$0xf] %v419
        %v433 = vld [vmem:[%s257] sm:$0xff]
        %v434 = vld [vmem:[%s257 + $0x8] sm:$0xff]
        %v435 = vld [vmem:[%s257 + $0x10] sm:$0xff]
        %v436 = vld [vmem:[%s257 + $0x18] sm:$0xff]
        %v437 = vld [vmem:[%s257 + $0x20] sm:$0xff]
        %v438 = vld [vmem:[%s257 + $0x28] sm:$0xff]
        %v439 = vld [vmem:[%s257 + $0x30] sm:$0xff]
        %v440 = vld [vmem:[%s257 + $0x38] sm:$0xff]
        %v441 = vmul.f32 %v433, 6.5
        %v442 = vmul.f32 %v434, 6.5
        %v443 = vmul.f32 %v435, 6.5
        %v444 = vmul.f32 %v436, 6.5
        %v445 = vmul.f32 %v437, 6.5
        %v446 = vmul.f32 %v438, 6.5
        %v447 = vmul.f32 %v439, 6.5
        %v448 = vmul.f32 %v440, 6.5
        %v449 = vadd.f32 %v441, 6.5
        %v450 = vadd.f32 %v442, 6.5
        %v451 = vadd.f32 %v443, 6.5
        %v452 = vadd.f32 %v444, 6.5
        %v453 = vadd.f32 %v445, 6.5
        %v454 = vadd.f32 %v446, 6.5
        %v455 = vadd.f32 %v447, 6.5
        %v456 = vadd.f32 %v448, 6.5
        %v457 = vmax.f32 %v449, 0.0
        %v458 = vmax.f32 %v450, 0.0
        %v459 = vmax.f32 %v451, 0.0
        %v460 = vmax.f32 %v452, 0.0
        %v461 = vmax.f32 %v453, 0.0
        %v462 = vmax.f32 %v454, 0.0
        %v463 = vmax.f32 %v455, 0.0
        %v464 = vmax.f32 %v456, 0.0
        %v465 = vmin.f32 %v457, 11.999999
        %v466 = vmin.f32 %v458, 11.999999
        %v467 = vmin.f32 %v459, 11.999999
        %v468 = vmin.f32 %v460, 11.999999
        %v469 = vmin.f32 %v461, 11.999999
        %v470 = vmin.f32 %v462, 11.999999
        %v471 = vmin.f32 %v463, 11.999999
        %v472 = vmin.f32 %v464, 11.999999
        %v473 = vld [vmem:[#allocation2] sm:$0xff]
        %v474 = vld [vmem:[#allocation2 + $0x8] sm:$0xff]
        %v475 = vld [vmem:[#allocation2 + $0x10] sm:$0xff]
        %v476 = vld [vmem:[#allocation2 + $0x18] sm:$0xff]
        %v477 = vld [vmem:[#allocation2 + $0x20] sm:$0xff]
        %v478 = vld [vmem:[#allocation2 + $0x28] sm:$0xff]
        %v479 = vld [vmem:[#allocation2 + $0x30] sm:$0xff]
        %v480 = vld [vmem:[#allocation2 + $0x38] sm:$0xff]
        %v481 = vand.u32 2147483647, %v465
        %v482 = vand.u32 2147483647, %v466
        %v483 = vand.u32 2147483647, %v467
        %v484 = vand.u32 2147483647, %v468
        %v485 = vand.u32 2147483647, %v469
        %v486 = vand.u32 2147483647, %v470
        %v487 = vand.u32 2147483647, %v471
        %v488 = vand.u32 2147483647, %v472
        %v489 = vsub.f32 1.0, %v481
        %v490 = vsub.f32 1.0, %v482
        %v491 = vsub.f32 1.0, %v483
        %v492 = vsub.f32 1.0, %v484
        %v493 = vsub.f32 1.0, %v485
        %v494 = vsub.f32 1.0, %v486
        %v495 = vsub.f32 1.0, %v487
        %v496 = vsub.f32 1.0, %v488
        %v497 = vmax.f32 %v489, 0.0
        %v498 = vmax.f32 %v490, 0.0
        %v499 = vmax.f32 %v491, 0.0
        %v500 = vmax.f32 %v492, 0.0
        %v501 = vmax.f32 %v493, 0.0
        %v502 = vmax.f32 %v494, 0.0
        %v503 = vmax.f32 %v495, 0.0
        %v504 = vmax.f32 %v496, 0.0
        %v505 = vmul.f32 %v473, %v497
        %v506 = vmul.f32 %v474, %v498
        %v507 = vmul.f32 %v475, %v499
        %v508 = vmul.f32 %v476, %v500
        %v509 = vmul.f32 %v477, %v501
        %v510 = vmul.f32 %v478, %v502
        %v511 = vmul.f32 %v479, %v503
        %v512 = vmul.f32 %v480, %v504
        %v513 = vadd.f32 %v505, 0.0
        %v514 = vadd.f32 %v506, 0.0
        %v515 = vadd.f32 %v507, 0.0
        %v516 = vadd.f32 %v508, 0.0
        %v517 = vadd.f32 %v509, 0.0
        %v518 = vadd.f32 %v510, 0.0
        %v519 = vadd.f32 %v511, 0.0
        %v520 = vadd.f32 %v512, 0.0
        %v521 = vld [vmem:[#allocation2] sm:$0xfe]
        %v522 = vld [vmem:[#allocation2 + $0x8] sm:$0xfe]
        %v523 = vld [vmem:[#allocation2 + $0x40] sm:$0x1]
        %v524 = vld [vmem:[#allocation2 + $0x48] sm:$0x1]
        %v525 = vsub.f32 %v465, 1.0
        %v526 = vsub.f32 %v466, 1.0
        %v527 = vsub.f32 %v467, 1.0
        %v528 = vsub.f32 %v468, 1.0
        %v529 = vsub.f32 %v469, 1.0
        %v530 = vsub.f32 %v470, 1.0
        %v531 = vsub.f32 %v471, 1.0
        %v532 = vsub.f32 %v472, 1.0
        %v533 = vand.u32 2147483647, %v525
        %v534 = vand.u32 2147483647, %v526
        %v535 = vand.u32 2147483647, %v527
        %v536 = vand.u32 2147483647, %v528
        %v537 = vand.u32 2147483647, %v529
        %v538 = vand.u32 2147483647, %v530
        %v539 = vand.u32 2147483647, %v531
        %v540 = vand.u32 2147483647, %v532
        %v541 = vsub.f32 1.0, %v533
        %v542 = vsub.f32 1.0, %v534
        %v543 = vsub.f32 1.0, %v535
        %v544 = vsub.f32 1.0, %v536
        %v545 = vsub.f32 1.0, %v537
        %v546 = vsub.f32 1.0, %v538
        %v547 = vsub.f32 1.0, %v539
        %v548 = vsub.f32 1.0, %v540
        %v549 = vmax.f32 %v541, 0.0
        %v550 = vmax.f32 %v542, 0.0
        %v551 = vmax.f32 %v543, 0.0
        %v552 = vmax.f32 %v544, 0.0
        %v553 = vmax.f32 %v545, 0.0
        %v554 = vmax.f32 %v546, 0.0
        %v555 = vmax.f32 %v547, 0.0
        %v556 = vmax.f32 %v548, 0.0
        %vm565 = vcmask 1040384
        %v566 = vrot.slane %v549, 7
        %v567 = vrot.slane %v550, 7
        %v568 = vrot.slane %v551, 7
        %v569 = vsel %vm565, %v566, %v568
        %v570 = vrot.slane %v552, 7
        %v571 = vsel %vm565, %v567, %v570
        %v572 = vrot.slane %v553, 7
        %v573 = vsel %vm565, %v568, %v572
        %v574 = vrot.slane %v554, 7
        %v575 = vsel %vm565, %v570, %v574
        %v576 = vrot.slane %v555, 7
        %v577 = vsel %vm565, %v572, %v576
        %v578 = vrot.slane %v556, 7
        %v579 = vsel %vm565, %v574, %v578
        %v590 = vmul.f32 %v521, %v566
        %v591 = vmul.f32 %v522, %v567
        %v592 = vmul.f32 %v475, %v569
        %v593 = vmul.f32 %v476, %v571
        %v594 = vmul.f32 %v477, %v573
        %v595 = vmul.f32 %v478, %v575
        %v596 = vmul.f32 %v479, %v577
        %v597 = vmul.f32 %v480, %v579
        %v598 = vmul.f32 %v523, %v576
        %v599 = vmul.f32 %v524, %v578
        %vm610 = vcmask 1046528
        %v611 = vrot.slane %v590, 1
        %v612 = vrot.slane %v592, 1
        %v613 = vsel %vm610, %v611, %v612
        %v614 = vrot.slane %v591, 1
        %v615 = vrot.slane %v593, 1
        %v616 = vsel %vm610, %v614, %v615
        %v617 = vrot.slane %v594, 1
        %v618 = vsel %vm610, %v612, %v617
        %v619 = vrot.slane %v595, 1
        %v620 = vsel %vm610, %v615, %v619
        %v621 = vrot.slane %v596, 1
        %v622 = vsel %vm610, %v617, %v621
        %v623 = vrot.slane %v597, 1
        %v624 = vsel %vm610, %v619, %v623
        %v625 = vrot.slane %v598, 1
        %v626 = vsel %vm610, %v621, %v625
        %v627 = vrot.slane %v599, 1
        %v628 = vsel %vm610, %v623, %v627
        %v637 = vadd.f32 %v513, %v613
        %v638 = vadd.f32 %v514, %v616
        %v639 = vadd.f32 %v515, %v618
        %v640 = vadd.f32 %v516, %v620
        %v641 = vadd.f32 %v517, %v622
        %v642 = vadd.f32 %v518, %v624
        %v643 = vadd.f32 %v519, %v626
        %v644 = vadd.f32 %v520, %v628
        %v645 = vld [vmem:[#allocation2] sm:$0xfc]
        %v646 = vld [vmem:[#allocation2 + $0x8] sm:$0xfc]
        %v647 = vld [vmem:[#allocation2 + $0x40] sm:$0x3]
        %v648 = vld [vmem:[#allocation2 + $0x48] sm:$0x3]
        %v649 = vsub.f32 %v465, 2.0
        %v650 = vsub.f32 %v466, 2.0
        %v651 = vsub.f32 %v467, 2.0
        %v652 = vsub.f32 %v468, 2.0
        %v653 = vsub.f32 %v469, 2.0
        %v654 = vsub.f32 %v470, 2.0
        %v655 = vsub.f32 %v471, 2.0
        %v656 = vsub.f32 %v472, 2.0
        %v657 = vand.u32 2147483647, %v649
        %v658 = vand.u32 2147483647, %v650
        %v659 = vand.u32 2147483647, %v651
        %v660 = vand.u32 2147483647, %v652
        %v661 = vand.u32 2147483647, %v653
        %v662 = vand.u32 2147483647, %v654
        %v663 = vand.u32 2147483647, %v655
        %v664 = vand.u32 2147483647, %v656
        %v665 = vsub.f32 1.0, %v657
        %v666 = vsub.f32 1.0, %v658
        %v667 = vsub.f32 1.0, %v659
        %v668 = vsub.f32 1.0, %v660
        %v669 = vsub.f32 1.0, %v661
        %v670 = vsub.f32 1.0, %v662
        %v671 = vsub.f32 1.0, %v663
        %v672 = vsub.f32 1.0, %v664
        %v673 = vmax.f32 %v665, 0.0
        %v674 = vmax.f32 %v666, 0.0
        %v675 = vmax.f32 %v667, 0.0
        %v676 = vmax.f32 %v668, 0.0
        %v677 = vmax.f32 %v669, 0.0
        %v678 = vmax.f32 %v670, 0.0
        %v679 = vmax.f32 %v671, 0.0
        %v680 = vmax.f32 %v672, 0.0
        %vm689 = vcmask 1041408
        %v690 = vrot.slane %v673, 6
        %v691 = vrot.slane %v674, 6
        %v692 = vrot.slane %v675, 6
        %v693 = vsel %vm689, %v690, %v692
        %v694 = vrot.slane %v676, 6
        %v695 = vsel %vm689, %v691, %v694
        %v696 = vrot.slane %v677, 6
        %v697 = vsel %vm689, %v692, %v696
        %v698 = vrot.slane %v678, 6
        %v699 = vsel %vm689, %v694, %v698
        %v700 = vrot.slane %v679, 6
        %v701 = vsel %vm689, %v696, %v700
        %v702 = vrot.slane %v680, 6
        %v703 = vsel %vm689, %v698, %v702
        %v714 = vmul.f32 %v645, %v690
        %v715 = vmul.f32 %v646, %v691
        %v716 = vmul.f32 %v475, %v693
        %v717 = vmul.f32 %v476, %v695
        %v718 = vmul.f32 %v477, %v697
        %v719 = vmul.f32 %v478, %v699
        %v720 = vmul.f32 %v479, %v701
        %v721 = vmul.f32 %v480, %v703
        %v722 = vmul.f32 %v647, %v700
        %v723 = vmul.f32 %v648, %v702
        %vm734 = vcmask 1045504
        %v735 = vrot.slane %v714, 2
        %v736 = vrot.slane %v716, 2
        %v737 = vsel %vm734, %v735, %v736
        %v738 = vrot.slane %v715, 2
        %v739 = vrot.slane %v717, 2
        %v740 = vsel %vm734, %v738, %v739
        %v741 = vrot.slane %v718, 2
        %v742 = vsel %vm734, %v736, %v741
        %v743 = vrot.slane %v719, 2
        %v744 = vsel %vm734, %v739, %v743
        %v745 = vrot.slane %v720, 2
        %v746 = vsel %vm734, %v741, %v745
        %v747 = vrot.slane %v721, 2
        %v748 = vsel %vm734, %v743, %v747
        %v749 = vrot.slane %v722, 2
        %v750 = vsel %vm734, %v745, %v749
        %v751 = vrot.slane %v723, 2
        %v752 = vsel %vm734, %v747, %v751
        %v761 = vadd.f32 %v637, %v737
        %v762 = vadd.f32 %v638, %v740
        %v763 = vadd.f32 %v639, %v742
        %v764 = vadd.f32 %v640, %v744
        %v765 = vadd.f32 %v641, %v746
        %v766 = vadd.f32 %v642, %v748
        %v767 = vadd.f32 %v643, %v750
        %v768 = vadd.f32 %v644, %v752
        %v769 = vld [vmem:[#allocation2] sm:$0xf8]
        %v770 = vld [vmem:[#allocation2 + $0x8] sm:$0xf8]
        %v771 = vld [vmem:[#allocation2 + $0x40] sm:$0x7]
        %v772 = vld [vmem:[#allocation2 + $0x48] sm:$0x7]
        %v773 = vsub.f32 %v465, 3.0
        %v774 = vsub.f32 %v466, 3.0
        %v775 = vsub.f32 %v467, 3.0
        %v776 = vsub.f32 %v468, 3.0
        %v777 = vsub.f32 %v469, 3.0
        %v778 = vsub.f32 %v470, 3.0
        %v779 = vsub.f32 %v471, 3.0
        %v780 = vsub.f32 %v472, 3.0
        %v781 = vand.u32 2147483647, %v773
        %v782 = vand.u32 2147483647, %v774
        %v783 = vand.u32 2147483647, %v775
        %v784 = vand.u32 2147483647, %v776
        %v785 = vand.u32 2147483647, %v777
        %v786 = vand.u32 2147483647, %v778
        %v787 = vand.u32 2147483647, %v779
        %v788 = vand.u32 2147483647, %v780
        %v789 = vsub.f32 1.0, %v781
        %v790 = vsub.f32 1.0, %v782
        %v791 = vsub.f32 1.0, %v783
        %v792 = vsub.f32 1.0, %v784
        %v793 = vsub.f32 1.0, %v785
        %v794 = vsub.f32 1.0, %v786
        %v795 = vsub.f32 1.0, %v787
        %v796 = vsub.f32 1.0, %v788
        %v797 = vmax.f32 %v789, 0.0
        %v798 = vmax.f32 %v790, 0.0
        %v799 = vmax.f32 %v791, 0.0
        %v800 = vmax.f32 %v792, 0.0
        %v801 = vmax.f32 %v793, 0.0
        %v802 = vmax.f32 %v794, 0.0
        %v803 = vmax.f32 %v795, 0.0
        %v804 = vmax.f32 %v796, 0.0
        %vm813 = vcmask 1042432
        %v814 = vrot.slane %v797, 5
        %v815 = vrot.slane %v798, 5
        %v816 = vrot.slane %v799, 5
        %v817 = vsel %vm813, %v814, %v816
        %v818 = vrot.slane %v800, 5
        %v819 = vsel %vm813, %v815, %v818
        %v820 = vrot.slane %v801, 5
        %v821 = vsel %vm813, %v816, %v820
        %v822 = vrot.slane %v802, 5
        %v823 = vsel %vm813, %v818, %v822
        %v824 = vrot.slane %v803, 5
        %v825 = vsel %vm813, %v820, %v824
        %v826 = vrot.slane %v804, 5
        %v827 = vsel %vm813, %v822, %v826
        %v838 = vmul.f32 %v769, %v814
        %v839 = vmul.f32 %v770, %v815
        %v840 = vmul.f32 %v475, %v817
        %v841 = vmul.f32 %v476, %v819
        %v842 = vmul.f32 %v477, %v821
        %v843 = vmul.f32 %v478, %v823
        %v844 = vmul.f32 %v479, %v825
        %v845 = vmul.f32 %v480, %v827
        %v846 = vmul.f32 %v771, %v824
        %v847 = vmul.f32 %v772, %v826
        %vm858 = vcmask 1044480
        %v859 = vrot.slane %v838, 3
        %v860 = vrot.slane %v840, 3
        %v861 = vsel %vm858, %v859, %v860
        %v862 = vrot.slane %v839, 3
        %v863 = vrot.slane %v841, 3
        %v864 = vsel %vm858, %v862, %v863
        %v865 = vrot.slane %v842, 3
        %v866 = vsel %vm858, %v860, %v865
        %v867 = vrot.slane %v843, 3
        %v868 = vsel %vm858, %v863, %v867
        %v869 = vrot.slane %v844, 3
        %v870 = vsel %vm858, %v865, %v869
        %v871 = vrot.slane %v845, 3
        %v872 = vsel %vm858, %v867, %v871
        %v873 = vrot.slane %v846, 3
        %v874 = vsel %vm858, %v869, %v873
        %v875 = vrot.slane %v847, 3
        %v876 = vsel %vm858, %v871, %v875
        %v885 = vadd.f32 %v761, %v861
        %v886 = vadd.f32 %v762, %v864
        %v887 = vadd.f32 %v763, %v866
        %v888 = vadd.f32 %v764, %v868
        %v889 = vadd.f32 %v765, %v870
        %v890 = vadd.f32 %v766, %v872
        %v891 = vadd.f32 %v767, %v874
        %v892 = vadd.f32 %v768, %v876
        %v893 = vld [vmem:[#allocation2] sm:$0xf0]
        %v894 = vld [vmem:[#allocation2 + $0x8] sm:$0xf0]
        %v895 = vld [vmem:[#allocation2 + $0x40] sm:$0xf]
        %v896 = vld [vmem:[#allocation2 + $0x48] sm:$0xf]
        %v897 = vsub.f32 %v465, 4.0
        %v898 = vsub.f32 %v466, 4.0
        %v899 = vsub.f32 %v467, 4.0
        %v900 = vsub.f32 %v468, 4.0
        %v901 = vsub.f32 %v469, 4.0
        %v902 = vsub.f32 %v470, 4.0
        %v903 = vsub.f32 %v471, 4.0
        %v904 = vsub.f32 %v472, 4.0
        %v905 = vand.u32 2147483647, %v897
        %v906 = vand.u32 2147483647, %v898
        %v907 = vand.u32 2147483647, %v899
        %v908 = vand.u32 2147483647, %v900
        %v909 = vand.u32 2147483647, %v901
        %v910 = vand.u32 2147483647, %v902
        %v911 = vand.u32 2147483647, %v903
        %v912 = vand.u32 2147483647, %v904
        %v913 = vsub.f32 1.0, %v905
        %v914 = vsub.f32 1.0, %v906
        %v915 = vsub.f32 1.0, %v907
        %v916 = vsub.f32 1.0, %v908
        %v917 = vsub.f32 1.0, %v909
        %v918 = vsub.f32 1.0, %v910
        %v919 = vsub.f32 1.0, %v911
        %v920 = vsub.f32 1.0, %v912
        %v921 = vmax.f32 %v913, 0.0
        %v922 = vmax.f32 %v914, 0.0
        %v923 = vmax.f32 %v915, 0.0
        %v924 = vmax.f32 %v916, 0.0
        %v925 = vmax.f32 %v917, 0.0
        %v926 = vmax.f32 %v918, 0.0
        %v927 = vmax.f32 %v919, 0.0
        %v928 = vmax.f32 %v920, 0.0
        %vm937 = vcmask 1043456
        %v938 = vrot.slane %v921, 4
        %v939 = vrot.slane %v922, 4
        %v940 = vrot.slane %v923, 4
        %v941 = vsel %vm937, %v938, %v940
        %v942 = vrot.slane %v924, 4
        %v943 = vsel %vm937, %v939, %v942
        %v944 = vrot.slane %v925, 4
        %v945 = vsel %vm937, %v940, %v944
        %v946 = vrot.slane %v926, 4
        %v947 = vsel %vm937, %v942, %v946
        %v948 = vrot.slane %v927, 4
        %v949 = vsel %vm937, %v944, %v948
        %v950 = vrot.slane %v928, 4
        %v951 = vsel %vm937, %v946, %v950
        %v962 = vmul.f32 %v893, %v938
        %v963 = vmul.f32 %v894, %v939
        %v964 = vmul.f32 %v475, %v941
        %v965 = vmul.f32 %v476, %v943
        %v966 = vmul.f32 %v477, %v945
        %v967 = vmul.f32 %v478, %v947
        %v968 = vmul.f32 %v479, %v949
        %v969 = vmul.f32 %v480, %v951
        %v970 = vmul.f32 %v895, %v948
        %v971 = vmul.f32 %v896, %v950
        %v982 = vrot.slane %v962, 4
        %v983 = vrot.slane %v964, 4
        %v984 = vsel %vm937, %v982, %v983
        %v985 = vrot.slane %v963, 4
        %v986 = vrot.slane %v965, 4
        %v987 = vsel %vm937, %v985, %v986
        %v988 = vrot.slane %v966, 4
        %v989 = vsel %vm937, %v983, %v988
        %v990 = vrot.slane %v967, 4
        %v991 = vsel %vm937, %v986, %v990
        %v992 = vrot.slane %v968, 4
        %v993 = vsel %vm937, %v988, %v992
        %v994 = vrot.slane %v969, 4
        %v995 = vsel %vm937, %v990, %v994
        %v996 = vrot.slane %v970, 4
        %v997 = vsel %vm937, %v992, %v996
        %v998 = vrot.slane %v971, 4
        %v999 = vsel %vm937, %v994, %v998
        %v1008 = vadd.f32 %v885, %v984
        %v1009 = vadd.f32 %v886, %v987
        %v1010 = vadd.f32 %v887, %v989
        %v1011 = vadd.f32 %v888, %v991
        %v1012 = vadd.f32 %v889, %v993
        %v1013 = vadd.f32 %v890, %v995
        %v1014 = vadd.f32 %v891, %v997
        %v1015 = vadd.f32 %v892, %v999
        %v1016 = vld [vmem:[#allocation2] sm:$0xe0]
        %v1017 = vld [vmem:[#allocation2 + $0x8] sm:$0xe0]
        %v1018 = vld [vmem:[#allocation2 + $0x40] sm:$0x1f]
        %v1019 = vld [vmem:[#allocation2 + $0x48] sm:$0x1f]
        %v1020 = vsub.f32 %v465, 5.0
        %v1021 = vsub.f32 %v466, 5.0
        %v1022 = vsub.f32 %v467, 5.0
        %v1023 = vsub.f32 %v468, 5.0
        %v1024 = vsub.f32 %v469, 5.0
        %v1025 = vsub.f32 %v470, 5.0
        %v1026 = vsub.f32 %v471, 5.0
        %v1027 = vsub.f32 %v472, 5.0
        %v1028 = vand.u32 2147483647, %v1020
        %v1029 = vand.u32 2147483647, %v1021
        %v1030 = vand.u32 2147483647, %v1022
        %v1031 = vand.u32 2147483647, %v1023
        %v1032 = vand.u32 2147483647, %v1024
        %v1033 = vand.u32 2147483647, %v1025
        %v1034 = vand.u32 2147483647, %v1026
        %v1035 = vand.u32 2147483647, %v1027
        %v1036 = vsub.f32 1.0, %v1028
        %v1037 = vsub.f32 1.0, %v1029
        %v1038 = vsub.f32 1.0, %v1030
        %v1039 = vsub.f32 1.0, %v1031
        %v1040 = vsub.f32 1.0, %v1032
        %v1041 = vsub.f32 1.0, %v1033
        %v1042 = vsub.f32 1.0, %v1034
        %v1043 = vsub.f32 1.0, %v1035
        %v1044 = vmax.f32 %v1036, 0.0
        %v1045 = vmax.f32 %v1037, 0.0
        %v1046 = vmax.f32 %v1038, 0.0
        %v1047 = vmax.f32 %v1039, 0.0
        %v1048 = vmax.f32 %v1040, 0.0
        %v1049 = vmax.f32 %v1041, 0.0
        %v1050 = vmax.f32 %v1042, 0.0
        %v1051 = vmax.f32 %v1043, 0.0
        %v1060 = vrot.slane %v1044, 3
        %v1061 = vrot.slane %v1045, 3
        %v1062 = vrot.slane %v1046, 3
        %v1063 = vsel %vm858, %v1060, %v1062
        %v1064 = vrot.slane %v1047, 3
        %v1065 = vsel %vm858, %v1061, %v1064
        %v1066 = vrot.slane %v1048, 3
        %v1067 = vsel %vm858, %v1062, %v1066
        %v1068 = vrot.slane %v1049, 3
        %v1069 = vsel %vm858, %v1064, %v1068
        %v1070 = vrot.slane %v1050, 3
        %v1071 = vsel %vm858, %v1066, %v1070
        %v1072 = vrot.slane %v1051, 3
        %v1073 = vsel %vm858, %v1068, %v1072
        %v1084 = vmul.f32 %v1016, %v1060
        %v1085 = vmul.f32 %v1017, %v1061
        %v1086 = vmul.f32 %v475, %v1063
        %v1087 = vmul.f32 %v476, %v1065
        %v1088 = vmul.f32 %v477, %v1067
        %v1089 = vmul.f32 %v478, %v1069
        %v1090 = vmul.f32 %v479, %v1071
        %v1091 = vmul.f32 %v480, %v1073
        %v1092 = vmul.f32 %v1018, %v1070
        %v1093 = vmul.f32 %v1019, %v1072
        %v1104 = vrot.slane %v1084, 5
        %v1105 = vrot.slane %v1086, 5
        %v1106 = vsel %vm813, %v1104, %v1105
        %v1107 = vrot.slane %v1085, 5
        %v1108 = vrot.slane %v1087, 5
        %v1109 = vsel %vm813, %v1107, %v1108
        %v1110 = vrot.slane %v1088, 5
        %v1111 = vsel %vm813, %v1105, %v1110
        %v1112 = vrot.slane %v1089, 5
        %v1113 = vsel %vm813, %v1108, %v1112
        %v1114 = vrot.slane %v1090, 5
        %v1115 = vsel %vm813, %v1110, %v1114
        %v1116 = vrot.slane %v1091, 5
        %v1117 = vsel %vm813, %v1112, %v1116
        %v1118 = vrot.slane %v1092, 5
        %v1119 = vsel %vm813, %v1114, %v1118
        %v1120 = vrot.slane %v1093, 5
        %v1121 = vsel %vm813, %v1116, %v1120
        %v1130 = vadd.f32 %v1008, %v1106
        %v1131 = vadd.f32 %v1009, %v1109
        %v1132 = vadd.f32 %v1010, %v1111
        %v1133 = vadd.f32 %v1011, %v1113
        %v1134 = vadd.f32 %v1012, %v1115
        %v1135 = vadd.f32 %v1013, %v1117
        %v1136 = vadd.f32 %v1014, %v1119
        %v1137 = vadd.f32 %v1015, %v1121
        %v1138 = vld [vmem:[#allocation2] sm:$0xc0]
        %v1139 = vld [vmem:[#allocation2 + $0x8] sm:$0xc0]
        %v1140 = vld [vmem:[#allocation2 + $0x40] sm:$0x3f]
        %v1141 = vld [vmem:[#allocation2 + $0x48] sm:$0x3f]
        %v1142 = vsub.f32 %v465, 6.0
        %v1143 = vsub.f32 %v466, 6.0
        %v1144 = vsub.f32 %v467, 6.0
        %v1145 = vsub.f32 %v468, 6.0
        %v1146 = vsub.f32 %v469, 6.0
        %v1147 = vsub.f32 %v470, 6.0
        %v1148 = vsub.f32 %v471, 6.0
        %v1149 = vsub.f32 %v472, 6.0
        %v1150 = vand.u32 2147483647, %v1142
        %v1151 = vand.u32 2147483647, %v1143
        %v1152 = vand.u32 2147483647, %v1144
        %v1153 = vand.u32 2147483647, %v1145
        %v1154 = vand.u32 2147483647, %v1146
        %v1155 = vand.u32 2147483647, %v1147
        %v1156 = vand.u32 2147483647, %v1148
        %v1157 = vand.u32 2147483647, %v1149
        %v1158 = vsub.f32 1.0, %v1150
        %v1159 = vsub.f32 1.0, %v1151
        %v1160 = vsub.f32 1.0, %v1152
        %v1161 = vsub.f32 1.0, %v1153
        %v1162 = vsub.f32 1.0, %v1154
        %v1163 = vsub.f32 1.0, %v1155
        %v1164 = vsub.f32 1.0, %v1156
        %v1165 = vsub.f32 1.0, %v1157
        %v1166 = vmax.f32 %v1158, 0.0
        %v1167 = vmax.f32 %v1159, 0.0
        %v1168 = vmax.f32 %v1160, 0.0
        %v1169 = vmax.f32 %v1161, 0.0
        %v1170 = vmax.f32 %v1162, 0.0
        %v1171 = vmax.f32 %v1163, 0.0
        %v1172 = vmax.f32 %v1164, 0.0
        %v1173 = vmax.f32 %v1165, 0.0
        %v1182 = vrot.slane %v1166, 2
        %v1183 = vrot.slane %v1167, 2
        %v1184 = vrot.slane %v1168, 2
        %v1185 = vsel %vm734, %v1182, %v1184
        %v1186 = vrot.slane %v1169, 2
        %v1187 = vsel %vm734, %v1183, %v1186
        %v1188 = vrot.slane %v1170, 2
        %v1189 = vsel %vm734, %v1184, %v1188
        %v1190 = vrot.slane %v1171, 2
        %v1191 = vsel %vm734, %v1186, %v1190
        %v1192 = vrot.slane %v1172, 2
        %v1193 = vsel %vm734, %v1188, %v1192
        %v1194 = vrot.slane %v1173, 2
        %v1195 = vsel %vm734, %v1190, %v1194
        %v1206 = vmul.f32 %v1138, %v1182
        %v1207 = vmul.f32 %v1139, %v1183
        %v1208 = vmul.f32 %v475, %v1185
        %v1209 = vmul.f32 %v476, %v1187
        %v1210 = vmul.f32 %v477, %v1189
        %v1211 = vmul.f32 %v478, %v1191
        %v1212 = vmul.f32 %v479, %v1193
        %v1213 = vmul.f32 %v480, %v1195
        %v1214 = vmul.f32 %v1140, %v1192
        %v1215 = vmul.f32 %v1141, %v1194
        %v1226 = vrot.slane %v1206, 6
        %v1227 = vrot.slane %v1208, 6
        %v1228 = vsel %vm689, %v1226, %v1227
        %v1229 = vrot.slane %v1207, 6
        %v1230 = vrot.slane %v1209, 6
        %v1231 = vsel %vm689, %v1229, %v1230
        %v1232 = vrot.slane %v1210, 6
        %v1233 = vsel %vm689, %v1227, %v1232
        %v1234 = vrot.slane %v1211, 6
        %v1235 = vsel %vm689, %v1230, %v1234
        %v1236 = vrot.slane %v1212, 6
        %v1237 = vsel %vm689, %v1232, %v1236
        %v1238 = vrot.slane %v1213, 6
        %v1239 = vsel %vm689, %v1234, %v1238
        %v1240 = vrot.slane %v1214, 6
        %v1241 = vsel %vm689, %v1236, %v1240
        %v1242 = vrot.slane %v1215, 6
        %v1243 = vsel %vm689, %v1238, %v1242
        %v1252 = vadd.f32 %v1130, %v1228
        %v1253 = vadd.f32 %v1131, %v1231
        %v1254 = vadd.f32 %v1132, %v1233
        %v1255 = vadd.f32 %v1133, %v1235
        %v1256 = vadd.f32 %v1134, %v1237
        %v1257 = vadd.f32 %v1135, %v1239
        %v1258 = vadd.f32 %v1136, %v1241
        %v1259 = vadd.f32 %v1137, %v1243
        %v1260 = vld [vmem:[#allocation2] sm:$0x80]
        %v1261 = vld [vmem:[#allocation2 + $0x8] sm:$0x80]
        %v1262 = vld [vmem:[#allocation2 + $0x40] sm:$0x7f]
        %v1263 = vld [vmem:[#allocation2 + $0x48] sm:$0x7f]
        %v1264 = vsub.f32 %v465, 7.0
        %v1265 = vsub.f32 %v466, 7.0
        %v1266 = vsub.f32 %v467, 7.0
        %v1267 = vsub.f32 %v468, 7.0
        %v1268 = vsub.f32 %v469, 7.0
        %v1269 = vsub.f32 %v470, 7.0
        %v1270 = vsub.f32 %v471, 7.0
        %v1271 = vsub.f32 %v472, 7.0
        %v1272 = vand.u32 2147483647, %v1264
        %v1273 = vand.u32 2147483647, %v1265
        %v1274 = vand.u32 2147483647, %v1266
        %v1275 = vand.u32 2147483647, %v1267
        %v1276 = vand.u32 2147483647, %v1268
        %v1277 = vand.u32 2147483647, %v1269
        %v1278 = vand.u32 2147483647, %v1270
        %v1279 = vand.u32 2147483647, %v1271
        %v1280 = vsub.f32 1.0, %v1272
        %v1281 = vsub.f32 1.0, %v1273
        %v1282 = vsub.f32 1.0, %v1274
        %v1283 = vsub.f32 1.0, %v1275
        %v1284 = vsub.f32 1.0, %v1276
        %v1285 = vsub.f32 1.0, %v1277
        %v1286 = vsub.f32 1.0, %v1278
        %v1287 = vsub.f32 1.0, %v1279
        %v1288 = vmax.f32 %v1280, 0.0
        %v1289 = vmax.f32 %v1281, 0.0
        %v1290 = vmax.f32 %v1282, 0.0
        %v1291 = vmax.f32 %v1283, 0.0
        %v1292 = vmax.f32 %v1284, 0.0
        %v1293 = vmax.f32 %v1285, 0.0
        %v1294 = vmax.f32 %v1286, 0.0
        %v1295 = vmax.f32 %v1287, 0.0
        %v1304 = vrot.slane %v1288, 1
        %v1305 = vrot.slane %v1289, 1
        %v1306 = vrot.slane %v1290, 1
        %v1307 = vsel %vm610, %v1304, %v1306
        %v1308 = vrot.slane %v1291, 1
        %v1309 = vsel %vm610, %v1305, %v1308
        %v1310 = vrot.slane %v1292, 1
        %v1311 = vsel %vm610, %v1306, %v1310
        %v1312 = vrot.slane %v1293, 1
        %v1313 = vsel %vm610, %v1308, %v1312
        %v1314 = vrot.slane %v1294, 1
        %v1315 = vsel %vm610, %v1310, %v1314
        %v1316 = vrot.slane %v1295, 1
        %v1317 = vsel %vm610, %v1312, %v1316
        %v1328 = vmul.f32 %v1260, %v1304
        %v1329 = vmul.f32 %v1261, %v1305
        %v1330 = vmul.f32 %v475, %v1307
        %v1331 = vmul.f32 %v476, %v1309
        %v1332 = vmul.f32 %v477, %v1311
        %v1333 = vmul.f32 %v478, %v1313
        %v1334 = vmul.f32 %v479, %v1315
        %v1335 = vmul.f32 %v480, %v1317
        %v1336 = vmul.f32 %v1262, %v1314
        %v1337 = vmul.f32 %v1263, %v1316
        %v1348 = vrot.slane %v1328, 7
        %v1349 = vrot.slane %v1330, 7
        %v1350 = vsel %vm565, %v1348, %v1349
        %v1351 = vrot.slane %v1329, 7
        %v1352 = vrot.slane %v1331, 7
        %v1353 = vsel %vm565, %v1351, %v1352
        %v1354 = vrot.slane %v1332, 7
        %v1355 = vsel %vm565, %v1349, %v1354
        %v1356 = vrot.slane %v1333, 7
        %v1357 = vsel %vm565, %v1352, %v1356
        %v1358 = vrot.slane %v1334, 7
        %v1359 = vsel %vm565, %v1354, %v1358
        %v1360 = vrot.slane %v1335, 7
        %v1361 = vsel %vm565, %v1356, %v1360
        %v1362 = vrot.slane %v1336, 7
        %v1363 = vsel %vm565, %v1358, %v1362
        %v1364 = vrot.slane %v1337, 7
        %v1365 = vsel %vm565, %v1360, %v1364
        %v1374 = vadd.f32 %v1252, %v1350
        %v1375 = vadd.f32 %v1253, %v1353
        %v1376 = vadd.f32 %v1254, %v1355
        %v1377 = vadd.f32 %v1255, %v1357
        %v1378 = vadd.f32 %v1256, %v1359
        %v1379 = vadd.f32 %v1257, %v1361
        %v1380 = vadd.f32 %v1258, %v1363
        %v1381 = vadd.f32 %v1259, %v1365
        %v1382 = vld [vmem:[#allocation2 + $0x40] sm:$0xff]
        %v1383 = vld [vmem:[#allocation2 + $0x48] sm:$0xff]
        %v1384 = vsub.f32 %v465, 8.0
        %v1385 = vsub.f32 %v466, 8.0
        %v1386 = vsub.f32 %v467, 8.0
        %v1387 = vsub.f32 %v468, 8.0
        %v1388 = vsub.f32 %v469, 8.0
        %v1389 = vsub.f32 %v470, 8.0
        %v1390 = vsub.f32 %v471, 8.0
        %v1391 = vsub.f32 %v472, 8.0
        %v1392 = vand.u32 2147483647, %v1384
        %v1393 = vand.u32 2147483647, %v1385
        %v1394 = vand.u32 2147483647, %v1386
        %v1395 = vand.u32 2147483647, %v1387
        %v1396 = vand.u32 2147483647, %v1388
        %v1397 = vand.u32 2147483647, %v1389
        %v1398 = vand.u32 2147483647, %v1390
        %v1399 = vand.u32 2147483647, %v1391
        %v1400 = vsub.f32 1.0, %v1392
        %v1401 = vsub.f32 1.0, %v1393
        %v1402 = vsub.f32 1.0, %v1394
        %v1403 = vsub.f32 1.0, %v1395
        %v1404 = vsub.f32 1.0, %v1396
        %v1405 = vsub.f32 1.0, %v1397
        %v1406 = vsub.f32 1.0, %v1398
        %v1407 = vsub.f32 1.0, %v1399
        %v1408 = vmax.f32 %v1400, 0.0
        %v1409 = vmax.f32 %v1401, 0.0
        %v1410 = vmax.f32 %v1402, 0.0
        %v1411 = vmax.f32 %v1403, 0.0
        %v1412 = vmax.f32 %v1404, 0.0
        %v1413 = vmax.f32 %v1405, 0.0
        %v1414 = vmax.f32 %v1406, 0.0
        %v1415 = vmax.f32 %v1407, 0.0
        %v1416 = vmul.f32 %v475, %v1408
        %v1417 = vmul.f32 %v476, %v1409
        %v1418 = vmul.f32 %v477, %v1410
        %v1419 = vmul.f32 %v478, %v1411
        %v1420 = vmul.f32 %v479, %v1412
        %v1421 = vmul.f32 %v480, %v1413
        %v1422 = vmul.f32 %v1382, %v1414
        %v1423 = vmul.f32 %v1383, %v1415
        %v1424 = vadd.f32 %v1374, %v1416
        %v1425 = vadd.f32 %v1375, %v1417
        %v1426 = vadd.f32 %v1376, %v1418
        %v1427 = vadd.f32 %v1377, %v1419
        %v1428 = vadd.f32 %v1378, %v1420
        %v1429 = vadd.f32 %v1379, %v1421
        %v1430 = vadd.f32 %v1380, %v1422
        %v1431 = vadd.f32 %v1381, %v1423
        %v1432 = vld [vmem:[#allocation2 + $0x10] sm:$0xfe]
        %v1433 = vld [vmem:[#allocation2 + $0x18] sm:$0xfe]
        %v1434 = vld [vmem:[#allocation2 + $0x50] sm:$0x1]
        %v1435 = vld [vmem:[#allocation2 + $0x58] sm:$0x1]
        %v1436 = vsub.f32 %v465, 9.0
        %v1437 = vsub.f32 %v466, 9.0
        %v1438 = vsub.f32 %v467, 9.0
        %v1439 = vsub.f32 %v468, 9.0
        %v1440 = vsub.f32 %v469, 9.0
        %v1441 = vsub.f32 %v470, 9.0
        %v1442 = vsub.f32 %v471, 9.0
        %v1443 = vsub.f32 %v472, 9.0
        %v1444 = vand.u32 2147483647, %v1436
        %v1445 = vand.u32 2147483647, %v1437
        %v1446 = vand.u32 2147483647, %v1438
        %v1447 = vand.u32 2147483647, %v1439
        %v1448 = vand.u32 2147483647, %v1440
        %v1449 = vand.u32 2147483647, %v1441
        %v1450 = vand.u32 2147483647, %v1442
        %v1451 = vand.u32 2147483647, %v1443
        %v1452 = vsub.f32 1.0, %v1444
        %v1453 = vsub.f32 1.0, %v1445
        %v1454 = vsub.f32 1.0, %v1446
        %v1455 = vsub.f32 1.0, %v1447
        %v1456 = vsub.f32 1.0, %v1448
        %v1457 = vsub.f32 1.0, %v1449
        %v1458 = vsub.f32 1.0, %v1450
        %v1459 = vsub.f32 1.0, %v1451
        %v1460 = vmax.f32 %v1452, 0.0
        %v1461 = vmax.f32 %v1453, 0.0
        %v1462 = vmax.f32 %v1454, 0.0
        %v1463 = vmax.f32 %v1455, 0.0
        %v1464 = vmax.f32 %v1456, 0.0
        %v1465 = vmax.f32 %v1457, 0.0
        %v1466 = vmax.f32 %v1458, 0.0
        %v1467 = vmax.f32 %v1459, 0.0
        %v1476 = vrot.slane %v1460, 7
        %v1477 = vrot.slane %v1461, 7
        %v1478 = vrot.slane %v1462, 7
        %v1479 = vsel %vm565, %v1476, %v1478
        %v1480 = vrot.slane %v1463, 7
        %v1481 = vsel %vm565, %v1477, %v1480
        %v1482 = vrot.slane %v1464, 7
        %v1483 = vsel %vm565, %v1478, %v1482
        %v1484 = vrot.slane %v1465, 7
        %v1485 = vsel %vm565, %v1480, %v1484
        %v1486 = vrot.slane %v1466, 7
        %v1487 = vsel %vm565, %v1482, %v1486
        %v1488 = vrot.slane %v1467, 7
        %v1489 = vsel %vm565, %v1484, %v1488
        %v1500 = vmul.f32 %v1432, %v1476
        %v1501 = vmul.f32 %v1433, %v1477
        %v1502 = vmul.f32 %v477, %v1479
        %v1503 = vmul.f32 %v478, %v1481
        %v1504 = vmul.f32 %v479, %v1483
        %v1505 = vmul.f32 %v480, %v1485
        %v1506 = vmul.f32 %v1382, %v1487
        %v1507 = vmul.f32 %v1383, %v1489
        %v1508 = vmul.f32 %v1434, %v1486
        %v1509 = vmul.f32 %v1435, %v1488
        %v1520 = vrot.slane %v1500, 1
        %v1521 = vrot.slane %v1502, 1
        %v1522 = vsel %vm610, %v1520, %v1521
        %v1523 = vrot.slane %v1501, 1
        %v1524 = vrot.slane %v1503, 1
        %v1525 = vsel %vm610, %v1523, %v1524
        %v1526 = vrot.slane %v1504, 1
        %v1527 = vsel %vm610, %v1521, %v1526
        %v1528 = vrot.slane %v1505, 1
        %v1529 = vsel %vm610, %v1524, %v1528
        %v1530 = vrot.slane %v1506, 1
        %v1531 = vsel %vm610, %v1526, %v1530
        %v1532 = vrot.slane %v1507, 1
        %v1533 = vsel %vm610, %v1528, %v1532
        %v1534 = vrot.slane %v1508, 1
        %v1535 = vsel %vm610, %v1530, %v1534
        %v1536 = vrot.slane %v1509, 1
        %v1537 = vsel %vm610, %v1532, %v1536
        %v1546 = vadd.f32 %v1424, %v1522
        %v1547 = vadd.f32 %v1425, %v1525
        %v1548 = vadd.f32 %v1426, %v1527
        %v1549 = vadd.f32 %v1427, %v1529
        %v1550 = vadd.f32 %v1428, %v1531
        %v1551 = vadd.f32 %v1429, %v1533
        %v1552 = vadd.f32 %v1430, %v1535
        %v1553 = vadd.f32 %v1431, %v1537
        %v1554 = vld [vmem:[#allocation2 + $0x10] sm:$0xfc]
        %v1555 = vld [vmem:[#allocation2 + $0x18] sm:$0xfc]
        %v1556 = vld [vmem:[#allocation2 + $0x50] sm:$0x3]
        %v1557 = vld [vmem:[#allocation2 + $0x58] sm:$0x3]
        %v1558 = vsub.f32 %v465, 10.0
        %v1559 = vsub.f32 %v466, 10.0
        %v1560 = vsub.f32 %v467, 10.0
        %v1561 = vsub.f32 %v468, 10.0
        %v1562 = vsub.f32 %v469, 10.0
        %v1563 = vsub.f32 %v470, 10.0
        %v1564 = vsub.f32 %v471, 10.0
        %v1565 = vsub.f32 %v472, 10.0
        %v1566 = vand.u32 2147483647, %v1558
        %v1567 = vand.u32 2147483647, %v1559
        %v1568 = vand.u32 2147483647, %v1560
        %v1569 = vand.u32 2147483647, %v1561
        %v1570 = vand.u32 2147483647, %v1562
        %v1571 = vand.u32 2147483647, %v1563
        %v1572 = vand.u32 2147483647, %v1564
        %v1573 = vand.u32 2147483647, %v1565
        %v1574 = vsub.f32 1.0, %v1566
        %v1575 = vsub.f32 1.0, %v1567
        %v1576 = vsub.f32 1.0, %v1568
        %v1577 = vsub.f32 1.0, %v1569
        %v1578 = vsub.f32 1.0, %v1570
        %v1579 = vsub.f32 1.0, %v1571
        %v1580 = vsub.f32 1.0, %v1572
        %v1581 = vsub.f32 1.0, %v1573
        %v1582 = vmax.f32 %v1574, 0.0
        %v1583 = vmax.f32 %v1575, 0.0
        %v1584 = vmax.f32 %v1576, 0.0
        %v1585 = vmax.f32 %v1577, 0.0
        %v1586 = vmax.f32 %v1578, 0.0
        %v1587 = vmax.f32 %v1579, 0.0
        %v1588 = vmax.f32 %v1580, 0.0
        %v1589 = vmax.f32 %v1581, 0.0
        %v1598 = vrot.slane %v1582, 6
        %v1599 = vrot.slane %v1583, 6
        %v1600 = vrot.slane %v1584, 6
        %v1601 = vsel %vm689, %v1598, %v1600
        %v1602 = vrot.slane %v1585, 6
        %v1603 = vsel %vm689, %v1599, %v1602
        %v1604 = vrot.slane %v1586, 6
        %v1605 = vsel %vm689, %v1600, %v1604
        %v1606 = vrot.slane %v1587, 6
        %v1607 = vsel %vm689, %v1602, %v1606
        %v1608 = vrot.slane %v1588, 6
        %v1609 = vsel %vm689, %v1604, %v1608
        %v1610 = vrot.slane %v1589, 6
        %v1611 = vsel %vm689, %v1606, %v1610
        %v1622 = vmul.f32 %v1554, %v1598
        %v1623 = vmul.f32 %v1555, %v1599
        %v1624 = vmul.f32 %v477, %v1601
        %v1625 = vmul.f32 %v478, %v1603
        %v1626 = vmul.f32 %v479, %v1605
        %v1627 = vmul.f32 %v480, %v1607
        %v1628 = vmul.f32 %v1382, %v1609
        %v1629 = vmul.f32 %v1383, %v1611
        %v1630 = vmul.f32 %v1556, %v1608
        %v1631 = vmul.f32 %v1557, %v1610
        %v1642 = vrot.slane %v1622, 2
        %v1643 = vrot.slane %v1624, 2
        %v1644 = vsel %vm734, %v1642, %v1643
        %v1645 = vrot.slane %v1623, 2
        %v1646 = vrot.slane %v1625, 2
        %v1647 = vsel %vm734, %v1645, %v1646
        %v1648 = vrot.slane %v1626, 2
        %v1649 = vsel %vm734, %v1643, %v1648
        %v1650 = vrot.slane %v1627, 2
        %v1651 = vsel %vm734, %v1646, %v1650
        %v1652 = vrot.slane %v1628, 2
        %v1653 = vsel %vm734, %v1648, %v1652
        %v1654 = vrot.slane %v1629, 2
        %v1655 = vsel %vm734, %v1650, %v1654
        %v1656 = vrot.slane %v1630, 2
        %v1657 = vsel %vm734, %v1652, %v1656
        %v1658 = vrot.slane %v1631, 2
        %v1659 = vsel %vm734, %v1654, %v1658
        %v1668 = vadd.f32 %v1546, %v1644
        %v1669 = vadd.f32 %v1547, %v1647
        %v1670 = vadd.f32 %v1548, %v1649
        %v1671 = vadd.f32 %v1549, %v1651
        %v1672 = vadd.f32 %v1550, %v1653
        %v1673 = vadd.f32 %v1551, %v1655
        %v1674 = vadd.f32 %v1552, %v1657
        %v1675 = vadd.f32 %v1553, %v1659
        %v1676 = vld [vmem:[#allocation2 + $0x10] sm:$0xf8]
        %v1677 = vld [vmem:[#allocation2 + $0x18] sm:$0xf8]
        %v1678 = vld [vmem:[#allocation2 + $0x50] sm:$0x7]
        %v1679 = vld [vmem:[#allocation2 + $0x58] sm:$0x7]
        %v1680 = vsub.f32 %v465, 11.0
        %v1681 = vsub.f32 %v466, 11.0
        %v1682 = vsub.f32 %v467, 11.0
        %v1683 = vsub.f32 %v468, 11.0
        %v1684 = vsub.f32 %v469, 11.0
        %v1685 = vsub.f32 %v470, 11.0
        %v1686 = vsub.f32 %v471, 11.0
        %v1687 = vsub.f32 %v472, 11.0
        %v1688 = vand.u32 2147483647, %v1680
        %v1689 = vand.u32 2147483647, %v1681
        %v1690 = vand.u32 2147483647, %v1682
        %v1691 = vand.u32 2147483647, %v1683
        %v1692 = vand.u32 2147483647, %v1684
        %v1693 = vand.u32 2147483647, %v1685
        %v1694 = vand.u32 2147483647, %v1686
        %v1695 = vand.u32 2147483647, %v1687
        %v1696 = vsub.f32 1.0, %v1688
        %v1697 = vsub.f32 1.0, %v1689
        %v1698 = vsub.f32 1.0, %v1690
        %v1699 = vsub.f32 1.0, %v1691
        %v1700 = vsub.f32 1.0, %v1692
        %v1701 = vsub.f32 1.0, %v1693
        %v1702 = vsub.f32 1.0, %v1694
        %v1703 = vsub.f32 1.0, %v1695
        %v1704 = vmax.f32 %v1696, 0.0
        %v1705 = vmax.f32 %v1697, 0.0
        %v1706 = vmax.f32 %v1698, 0.0
        %v1707 = vmax.f32 %v1699, 0.0
        %v1708 = vmax.f32 %v1700, 0.0
        %v1709 = vmax.f32 %v1701, 0.0
        %v1710 = vmax.f32 %v1702, 0.0
        %v1711 = vmax.f32 %v1703, 0.0
        %v1720 = vrot.slane %v1704, 5
        %v1721 = vrot.slane %v1705, 5
        %v1722 = vrot.slane %v1706, 5
        %v1723 = vsel %vm813, %v1720, %v1722
        %v1724 = vrot.slane %v1707, 5
        %v1725 = vsel %vm813, %v1721, %v1724
        %v1726 = vrot.slane %v1708, 5
        %v1727 = vsel %vm813, %v1722, %v1726
        %v1728 = vrot.slane %v1709, 5
        %v1729 = vsel %vm813, %v1724, %v1728
        %v1730 = vrot.slane %v1710, 5
        %v1731 = vsel %vm813, %v1726, %v1730
        %v1732 = vrot.slane %v1711, 5
        %v1733 = vsel %vm813, %v1728, %v1732
        %v1744 = vmul.f32 %v1676, %v1720
        %v1745 = vmul.f32 %v1677, %v1721
        %v1746 = vmul.f32 %v477, %v1723
        %v1747 = vmul.f32 %v478, %v1725
        %v1748 = vmul.f32 %v479, %v1727
        %v1749 = vmul.f32 %v480, %v1729
        %v1750 = vmul.f32 %v1382, %v1731
        %v1751 = vmul.f32 %v1383, %v1733
        %v1752 = vmul.f32 %v1678, %v1730
        %v1753 = vmul.f32 %v1679, %v1732
        %v1764 = vrot.slane %v1744, 3
        %v1765 = vrot.slane %v1746, 3
        %v1766 = vsel %vm858, %v1764, %v1765
        %v1767 = vrot.slane %v1745, 3
        %v1768 = vrot.slane %v1747, 3
        %v1769 = vsel %vm858, %v1767, %v1768
        %v1770 = vrot.slane %v1748, 3
        %v1771 = vsel %vm858, %v1765, %v1770
        %v1772 = vrot.slane %v1749, 3
        %v1773 = vsel %vm858, %v1768, %v1772
        %v1774 = vrot.slane %v1750, 3
        %v1775 = vsel %vm858, %v1770, %v1774
        %v1776 = vrot.slane %v1751, 3
        %v1777 = vsel %vm858, %v1772, %v1776
        %v1778 = vrot.slane %v1752, 3
        %v1779 = vsel %vm858, %v1774, %v1778
        %v1780 = vrot.slane %v1753, 3
        %v1781 = vsel %vm858, %v1776, %v1780
        %v1790 = vadd.f32 %v1668, %v1766
        %v1791 = vadd.f32 %v1669, %v1769
        %v1792 = vadd.f32 %v1670, %v1771
        %v1793 = vadd.f32 %v1671, %v1773
        %v1794 = vadd.f32 %v1672, %v1775
        %v1795 = vadd.f32 %v1673, %v1777
        %v1796 = vadd.f32 %v1674, %v1779
        %v1797 = vadd.f32 %v1675, %v1781
        %v1798 = vld [vmem:[#allocation2 + $0x10] sm:$0xf0]
        %v1799 = vld [vmem:[#allocation2 + $0x18] sm:$0xf0]
        %v1800 = vld [vmem:[#allocation2 + $0x50] sm:$0xf]
        %v1801 = vld [vmem:[#allocation2 + $0x58] sm:$0xf]
        %v1802 = vsub.f32 %v465, 12.0
        %v1803 = vsub.f32 %v466, 12.0
        %v1804 = vsub.f32 %v467, 12.0
        %v1805 = vsub.f32 %v468, 12.0
        %v1806 = vsub.f32 %v469, 12.0
        %v1807 = vsub.f32 %v470, 12.0
        %v1808 = vsub.f32 %v471, 12.0
        %v1809 = vsub.f32 %v472, 12.0
        %v1810 = vand.u32 2147483647, %v1802
        %v1811 = vand.u32 2147483647, %v1803
        %v1812 = vand.u32 2147483647, %v1804
        %v1813 = vand.u32 2147483647, %v1805
        %v1814 = vand.u32 2147483647, %v1806
        %v1815 = vand.u32 2147483647, %v1807
        %v1816 = vand.u32 2147483647, %v1808
        %v1817 = vand.u32 2147483647, %v1809
        %v1818 = vsub.f32 1.0, %v1810
        %v1819 = vsub.f32 1.0, %v1811
        %v1820 = vsub.f32 1.0, %v1812
        %v1821 = vsub.f32 1.0, %v1813
        %v1822 = vsub.f32 1.0, %v1814
        %v1823 = vsub.f32 1.0, %v1815
        %v1824 = vsub.f32 1.0, %v1816
        %v1825 = vsub.f32 1.0, %v1817
        %v1826 = vmax.f32 %v1818, 0.0
        %v1827 = vmax.f32 %v1819, 0.0
        %v1828 = vmax.f32 %v1820, 0.0
        %v1829 = vmax.f32 %v1821, 0.0
        %v1830 = vmax.f32 %v1822, 0.0
        %v1831 = vmax.f32 %v1823, 0.0
        %v1832 = vmax.f32 %v1824, 0.0
        %v1833 = vmax.f32 %v1825, 0.0
        %v1842 = vrot.slane %v1826, 4
        %v1843 = vrot.slane %v1827, 4
        %v1844 = vrot.slane %v1828, 4
        %v1845 = vsel %vm937, %v1842, %v1844
        %v1846 = vrot.slane %v1829, 4
        %v1847 = vsel %vm937, %v1843, %v1846
        %v1848 = vrot.slane %v1830, 4
        %v1849 = vsel %vm937, %v1844, %v1848
        %v1850 = vrot.slane %v1831, 4
        %v1851 = vsel %vm937, %v1846, %v1850
        %v1852 = vrot.slane %v1832, 4
        %v1853 = vsel %vm937, %v1848, %v1852
        %v1854 = vrot.slane %v1833, 4
        %v1855 = vsel %vm937, %v1850, %v1854
        %v1866 = vmul.f32 %v1798, %v1842
        %v1867 = vmul.f32 %v1799, %v1843
        %v1868 = vmul.f32 %v477, %v1845
        %v1869 = vmul.f32 %v478, %v1847
        %v1870 = vmul.f32 %v479, %v1849
        %v1871 = vmul.f32 %v480, %v1851
        %v1872 = vmul.f32 %v1382, %v1853
        %v1873 = vmul.f32 %v1383, %v1855
        %v1874 = vmul.f32 %v1800, %v1852
        %v1875 = vmul.f32 %v1801, %v1854
        %v1886 = vrot.slane %v1866, 4
        %v1887 = vrot.slane %v1868, 4
        %v1888 = vsel %vm937, %v1886, %v1887
        %v1889 = vrot.slane %v1867, 4
        %v1890 = vrot.slane %v1869, 4
        %v1891 = vsel %vm937, %v1889, %v1890
        %v1892 = vrot.slane %v1870, 4
        %v1893 = vsel %vm937, %v1887, %v1892
        %v1894 = vrot.slane %v1871, 4
        %v1895 = vsel %vm937, %v1890, %v1894
        %v1896 = vrot.slane %v1872, 4
        %v1897 = vsel %vm937, %v1892, %v1896
        %v1898 = vrot.slane %v1873, 4
        %v1899 = vsel %vm937, %v1894, %v1898
        %v1900 = vrot.slane %v1874, 4
        %v1901 = vsel %vm937, %v1896, %v1900
        %v1902 = vrot.slane %v1875, 4
        %v1903 = vsel %vm937, %v1898, %v1902
        %v1912 = vadd.f32 %v1790, %v1888
        %v1913 = vadd.f32 %v1791, %v1891
        %v1914 = vadd.f32 %v1792, %v1893
        %v1915 = vadd.f32 %v1793, %v1895
        %v1916 = vadd.f32 %v1794, %v1897
        %v1917 = vadd.f32 %v1795, %v1899
        %v1918 = vadd.f32 %v1796, %v1901
        %v1919 = vadd.f32 %v1797, %v1903
        %v1920 = vld [vmem:[%s3] sm:$0xff]
        %v1921 = vld [vmem:[%s3 + $0x8] sm:$0xff]
        %v1922 = vld [vmem:[%s3 + $0x10] sm:$0xff]
        %v1923 = vld [vmem:[%s3 + $0x18] sm:$0xff]
        %1925 = vset.pattern.permute.xlu0 3
        %1926 = vperm.xlu0 %1925, %v1920
        %v1927 = vpop.permute.xlu0 %1926
        %1930 = vset.pattern.permute.xlu0 3
        %1931 = vperm.xlu0 %1930, %v1921
        %v1932 = vpop.permute.xlu0 %1931
        %1935 = vset.pattern.permute.xlu0 3
        %1936 = vperm.xlu0 %1935, %v1922
        %v1937 = vpop.permute.xlu0 %1936
        %1940 = vset.pattern.permute.xlu0 3
        %1941 = vperm.xlu0 %1940, %v1923
        %v1942 = vpop.permute.xlu0 %1941
        %v1944 = vmul.f32 %v1927, %v1912
        %v1945 = vmul.f32 %v1927, %v1913
        %v1946 = vmul.f32 %v1932, %v1914
        %v1947 = vmul.f32 %v1932, %v1915
        %v1948 = vmul.f32 %v1937, %v1916
        %v1949 = vmul.f32 %v1937, %v1917
        %v1950 = vmul.f32 %v1942, %v1918
        %v1951 = vmul.f32 %v1942, %v1919
        %1952 = vset.pattern.permute.xlu0 2
        %1953 = vperm.xlu0 %1952, %v1920
        %v1954 = vpop.permute.xlu0 %1953
        %1956 = vset.pattern.permute.xlu0 2
        %1957 = vperm.xlu0 %1956, %v1921
        %v1958 = vpop.permute.xlu0 %1957
        %1960 = vset.pattern.permute.xlu0 2
        %1961 = vperm.xlu0 %1960, %v1922
        %v1962 = vpop.permute.xlu0 %1961
        %1964 = vset.pattern.permute.xlu0 2
        %1965 = vperm.xlu0 %1964, %v1923
        %v1966 = vpop.permute.xlu0 %1965
        %v1968 = vadd.f32 %v1944, %v1954
        %v1969 = vadd.f32 %v1945, %v1954
        %v1970 = vadd.f32 %v1946, %v1958
        %v1971 = vadd.f32 %v1947, %v1958
        %v1972 = vadd.f32 %v1948, %v1962
        %v1973 = vadd.f32 %v1949, %v1962
        %v1974 = vadd.f32 %v1950, %v1966
        %v1975 = vadd.f32 %v1951, %v1966
        %v1976 = vmul.f32 %v1968, %v1912
        %v1977 = vmul.f32 %v1969, %v1913
        %v1978 = vmul.f32 %v1970, %v1914
        %v1979 = vmul.f32 %v1971, %v1915
        %v1980 = vmul.f32 %v1972, %v1916
        %v1981 = vmul.f32 %v1973, %v1917
        %v1982 = vmul.f32 %v1974, %v1918
        %v1983 = vmul.f32 %v1975, %v1919
        %1984 = vset.pattern.permute.xlu0 1
        %1985 = vperm.xlu0 %1984, %v1920
        %v1986 = vpop.permute.xlu0 %1985
        %1988 = vset.pattern.permute.xlu0 1
        %1989 = vperm.xlu0 %1988, %v1921
        %v1990 = vpop.permute.xlu0 %1989
        %1992 = vset.pattern.permute.xlu0 1
        %1993 = vperm.xlu0 %1992, %v1922
        %v1994 = vpop.permute.xlu0 %1993
        %1996 = vset.pattern.permute.xlu0 1
        %1997 = vperm.xlu0 %1996, %v1923
        %v1998 = vpop.permute.xlu0 %1997
        %v2000 = vadd.f32 %v1976, %v1986
        %v2001 = vadd.f32 %v1977, %v1986
        %v2002 = vadd.f32 %v1978, %v1990
        %v2003 = vadd.f32 %v1979, %v1990
        %v2004 = vadd.f32 %v1980, %v1994
        %v2005 = vadd.f32 %v1981, %v1994
        %v2006 = vadd.f32 %v1982, %v1998
        %v2007 = vadd.f32 %v1983, %v1998
        %v2008 = vmul.f32 %v2000, %v1912
        %v2009 = vmul.f32 %v2001, %v1913
        %v2010 = vmul.f32 %v2002, %v1914
        %v2011 = vmul.f32 %v2003, %v1915
        %v2012 = vmul.f32 %v2004, %v1916
        %v2013 = vmul.f32 %v2005, %v1917
        %v2014 = vmul.f32 %v2006, %v1918
        %v2015 = vmul.f32 %v2007, %v1919
        %2016 = vset.pattern.permute.xlu0 0
        %2017 = vperm.xlu0 %2016, %v1920
        %v2018 = vpop.permute.xlu0 %2017
        %2020 = vset.pattern.permute.xlu0 0
        %2021 = vperm.xlu0 %2020, %v1921
        %v2022 = vpop.permute.xlu0 %2021
        %2024 = vset.pattern.permute.xlu0 0
        %2025 = vperm.xlu0 %2024, %v1922
        %v2026 = vpop.permute.xlu0 %2025
        %2028 = vset.pattern.permute.xlu0 0
        %2029 = vperm.xlu0 %2028, %v1923
        %v2030 = vpop.permute.xlu0 %2029
        %v2032 = vadd.f32 %v2008, %v2018
        %v2033 = vadd.f32 %v2009, %v2018
        %v2034 = vadd.f32 %v2010, %v2022
        %v2035 = vadd.f32 %v2011, %v2022
        %v2036 = vadd.f32 %v2012, %v2026
        %v2037 = vadd.f32 %v2013, %v2026
        %v2038 = vadd.f32 %v2014, %v2030
        %v2039 = vadd.f32 %v2015, %v2030
        %v2040 = vadd.f32 %v1912, %v2032
        %v2041 = vadd.f32 %v1913, %v2033
        %v2042 = vadd.f32 %v1914, %v2034
        %v2043 = vadd.f32 %v1915, %v2035
        %v2044 = vadd.f32 %v1916, %v2036
        %v2045 = vadd.f32 %v1917, %v2037
        %v2046 = vadd.f32 %v1918, %v2038
        %v2047 = vadd.f32 %v1919, %v2039
        %2048 = vst [vmem:[%s283] sm:$0xff] %v2040
        %2049 = vst [vmem:[%s283 + $0x8] sm:$0xff] %v2041
        %2050 = vst [vmem:[%s283 + $0x10] sm:$0xff] %v2042
        %2051 = vst [vmem:[%s283 + $0x18] sm:$0xff] %v2043
        %2052 = vst [vmem:[%s283 + $0x20] sm:$0xff] %v2044
        %2053 = vst [vmem:[%s283 + $0x28] sm:$0xff] %v2045
        %2054 = vst [vmem:[%s283 + $0x30] sm:$0xff] %v2046
        %2055 = vst [vmem:[%s283 + $0x38] sm:$0xff] %v2047
        %s2056 = sand.u32 %s120, 1
        %s2057 = scalar_lea.sflag [#allocation6], %s2056
        %s2058 = sand.u32 %s120, 1
        %s2059 = smul.addr %s2058, 64
        %s2060 = scalar_lea.vmem [#allocation5], %s2059
        // Predicated region
        $region83: #{fwd.1} parent=73 // pred_check
          %p2061 = pneg %p130
        $region84: #{fwd.1} parent=73 // pred_check_branch
          %2063 = sbr.rel (%p2061) target = $region86
        $region85: #{fwd.1} parent=73 // pred_region
          %s2064 = smul.u32 2, %s18
          %s2066 = ssub.s32 1024, 1024
          %2067 = vsyncadd %s2057, %s2066
          %s2068 = smul.addr %s2064, 128
          %s2069 = scalar_lea.hbm %s4, %s2068
          %s2070 = sshll.u32 %s2060, 4
          %s2071 = int_to_ptr.vmem [resolvable:$true] %s2070
          %2076 = dma.vmem_to_hbm [thread:$0]  %s2071, 1024, %s2069, %s2057, 256, 1024, 16
        $region86: #{fwd.1} parent=73 // pred_fallthru
          _
      $region74: #{fwd.1} parent=5 // pred_fallthru
        _
      %p2077 = scmp.le.s32.totalorder 2, %s13
      // Predicated region
      $region87: #{fwd.1} parent=5 // pred_check
        %p2078 = pneg %p2077
      $region88: #{fwd.1} parent=5 // pred_check_branch
        %2080 = sbr.rel (%p2078) target = $region90
      $region89: #{fwd.1} parent=5 // pred_region
        %s2081 = ssub.s32 %s13, 2
        // Predicated region
        $region91: #{fwd.1} parent=89 // pred_check
          %p2082 = pneg %p136
        $region92: #{fwd.1} parent=89 // pred_check_branch
          %2084 = sbr.rel (%p2082) target = $region94
        $region93: #{fwd.1} parent=89 // pred_region
          %s2085 = sand.u32 %s121, 1
          %s2086 = scalar_lea.sflag [#allocation6], %s2085
          %s2087 = sand.u32 %s121, 1
          %s2088 = smul.addr %s2087, 64
          %s2089 = scalar_lea.vmem [#allocation5], %s2088
          %2090 = dma.done %s2086, 1024
        $region94: #{fwd.1} parent=89 // pred_fallthru
          _
      $region90: #{fwd.1} parent=5 // pred_fallthru
        _
    $region6: #{fwd.1} parent=1 // loop_footer
      %s17 = sadd.s32 1, %s13
    $region7: #{fwd.1} parent=1 // loop_footer_branch
      %12 = sbr.rel target = $region3
    $region8: #{fwd.1} parent=1 // loop_exit
      _
    %2091 = vsyncpa [#allocation6], 1
    %s2092 = scalar_lea.sflag [#allocation6], 1
    %2093 = vsyncpa %s2092, 1

</llo_original>
